<compile_context>
chip_gen: v6e
topology: v6e:2x2x1
jax: 0.10.0
libtpu: 0.0.40
codegen_flags: <defaults>
</compile_context>

<pallas_src>
import functools

import jax
import jax.numpy as jnp
from jax.experimental import pallas as pl
from jax.experimental.pallas import tpu as pltpu


# --------------------------------------------------------------------------
# Kernel 1: pooled Q/K projection + per-head softmax  (grid = (B,))
# --------------------------------------------------------------------------
def _attn_weights_kernel(qp_ref, kp_ref, wq_ref, wk_ref, a_ref, *, heads, scale):
    """a_ref[0, h, s, t] = softmax_t(scale * <Q(q_pool)[s, h], K(k_pool)[t, h]>)."""
    D = qp_ref.shape[2]
    dh = D // heads

    q_proj = jnp.dot(qp_ref[0], wq_ref[...],
                     preferred_element_type=jnp.float32) * scale      # (S, D) f32
    k_proj = jnp.dot(kp_ref[0], wk_ref[...],
                     preferred_element_type=jnp.float32)              # (T, D) f32

    for h in range(heads):                                            # static loop
        qh = q_proj[:, h * dh:(h + 1) * dh]                           # (S, dh)
        kh = k_proj[:, h * dh:(h + 1) * dh]                           # (T, dh)
        logits = jax.lax.dot_general(qh, kh, (((1,), (1,)), ((), ())),
                                     preferred_element_type=jnp.float32)   # (S, T)
        m = jnp.max(logits, axis=-1, keepdims=True)
        e = jnp.exp(logits - m)
        # direct per-head slice store (compact output, no concat/broadcast)
        a_ref[0, h] = (e / jnp.sum(e, axis=-1, keepdims=True)).astype(a_ref.dtype)


# --------------------------------------------------------------------------
# Kernel 2: fused V-projection + attention combine  (grid = (B, P // TP))
#   One wide, lane-dense MXU matmul per spatial tile:
#     out[(s,c), p] = sum_{t,c'} M[(s,c), (t,c')] * v[(t,c'), p]
# --------------------------------------------------------------------------
def _fused_apply_kernel(m_ref, v_ref, o_ref):
    o_ref[0] = jnp.dot(m_ref[0], v_ref[0],
                       preferred_element_type=jnp.float32).astype(o_ref.dtype)


# --------------------------------------------------------------------------
# Tiling helpers
# --------------------------------------------------------------------------
def _choose_spatial_tile(P, want):
    """Largest multiple-of-128 divisor of P that is <= want (lane-dense tiles).
    Falls back to the full spatial extent (always a legal block)."""
    want = min(max(int(want), 128), P)
    if P <= want:
        return P
    tp = (want // 128) * 128
    while tp >= 128:
        if P % tp == 0:
            return tp
        tp -= 128
    return P


def _kernel2_vmem_need(S, D, T, tp, csize, osize):
    m_bytes = S * D * T * D * csize          # fused attn (x) Wv operand
    v_bytes = T * D * tp * csize             # v tile
    o_bytes = S * D * tp * osize             # output tile
    return 2 * (m_bytes + v_bytes + o_bytes) + (2 << 20)   # 2x: double buffering


# --------------------------------------------------------------------------
# Wrapper
# --------------------------------------------------------------------------
def channel_video_attention(q, k, v, params, *, heads,
                            compute_dtype=jnp.bfloat16, spatial_tile=256,
                            out_dtype=None):
    """q: (B,S,D,H,W)  k,v: (B,T,D,H,W); params = (Wq, Wk, Wv) in (out,in) layout."""
    wq, wk, wv = params
    B, S, D, H, W = q.shape
    T = k.shape[1]
    assert k.shape == (B, T, D, H, W) and v.shape == (B, T, D, H, W)
    assert D % heads == 0
    dh = D // heads
    scale = float(dh) ** -0.5
    P = H * W
    cdt = compute_dtype
    odt = q.dtype if out_dtype is None else out_dtype
    csize = jnp.dtype(cdt).itemsize
    osize = jnp.dtype(odt).itemsize

    try:
        vmem_cap = int(pltpu.get_tpu_info().vmem_capacity_bytes)
    except Exception:
        vmem_cap = 64 * 1024 * 1024          # conservative default (v7x per-core)
    vmem_budget = int(0.75 * vmem_cap)

    # ---- small wrapper-side prep (fused by XLA) ----
    # pooling lifted out of the kernel: kernel 1 never sees the (...,H,W) arrays
    q_pool = q.mean(axis=(-1, -2)).astype(cdt)             # (B, S, D)
    k_pool = k.mean(axis=(-1, -2)).astype(cdt)             # (B, T, D)
    wq_t = jnp.asarray(wq).T.astype(cdt)                   # (in, out): x @ wq_t == Q(x)
    wk_t = jnp.asarray(wk).T.astype(cdt)

    # torch flattening: v.permute(0,-1,-2,1,2).view(B, W*H, T, D).  We keep the
    # torch-ordered flat spatial axis (p = w*H + h) LAST -> TPU lanes, and fold
    # (T, D) into one contraction axis for kernel 2.  The (H,W)->(W,H) swap is
    # fused with the compute-dtype cast into a single XLA pass over v.
    # TODO(synk): when len_s < len_t it is cheaper to keep v in natural layout
    # and apply the equivalent spatial permutation to the (smaller) output.
    v_f = jnp.swapaxes(v, -1, -2).reshape(B, T * D, P).astype(cdt)

    # ---------------- kernel 1: compact per-head attention ----------------
    k1 = functools.partial(_attn_weights_kernel, heads=heads, scale=scale)
    flops1 = 2 * B * D * (S * D + T * D + S * T)
    bytes1 = csize * B * ((S + T) * D + 2 * D * D) + 4 * B * heads * S * T
    attn = pl.pallas_call(
        k1,
        out_shape=jax.ShapeDtypeStruct((B, heads, S, T), jnp.float32),
        grid=(B,),
        in_specs=[
            pl.BlockSpec((1, S, D), lambda b: (b, 0, 0)),
            pl.BlockSpec((1, T, D), lambda b: (b, 0, 0)),
            pl.BlockSpec((D, D), lambda b: (0, 0)),
            pl.BlockSpec((D, D), lambda b: (0, 0)),
        ],
        out_specs=pl.BlockSpec((1, heads, S, T), lambda b: (b, 0, 0, 0)),
        compiler_params=pltpu.CompilerParams(
            dimension_semantics=("parallel",),
            vmem_limit_bytes=32 * 1024 * 1024),
        cost_estimate=pl.CostEstimate(flops=int(flops1),
                                      transcendentals=int(B * heads * S * T),
                                      bytes_accessed=int(bytes1)),
    )(q_pool, k_pool, wq_t, wk_t)

    # ---- fuse attention with the V weight: one matmul operand per batch ----
    #   M[b, s*D + c, t*D + c'] = attn[b, head(c), s, t] * Wv[c, c']
    attn_sc = jnp.transpose(jnp.repeat(attn, dh, axis=1), (0, 2, 1, 3))   # (B,S,D,T)
    fused = attn_sc[..., None] * jnp.asarray(wv)[None, None, :, None, :]  # (B,S,D,T,D)
    fused = fused.reshape(B, S * D, T * D).astype(cdt)

    # ---------------- kernel 2: one wide MXU matmul per spatial tile ------
    TP = _choose_spatial_tile(P, spatial_tile)
    while (TP >= 256 and TP % 2 == 0 and (TP // 2) % 128 == 0
           and P % (TP // 2) == 0
           and _kernel2_vmem_need(S, D, T, TP, csize, osize) > vmem_budget):
        TP //= 2                                   # shrink tile to fit VMEM (v7x)
    n_p = P // TP
    vmem_limit = int(min(max(32 << 20,
                             _kernel2_vmem_need(S, D, T, TP, csize, osize)),
                         vmem_budget))

    flops2 = 2 * B * (S * D) * (T * D) * P
    # fused/M block is fetched once per batch (resident across the inner j axis)
    bytes2 = B * (S * D * T * D * csize + T * D * P * csize + S * D * P * osize)
    out_flat = pl.pallas_call(
        _fused_apply_kernel,
        out_shape=jax.ShapeDtypeStruct((B, S * D, P), odt),
        grid=(B, n_p),
        in_specs=[
            pl.BlockSpec((1, S * D, T * D), lambda b, j: (b, 0, 0)),  # resident over j
            pl.BlockSpec((1, T * D, TP), lambda b, j: (b, 0, j)),
        ],
        out_specs=pl.BlockSpec((1, S * D, TP), lambda b, j: (b, 0, j)),
        compiler_params=pltpu.CompilerParams(
            dimension_semantics=("parallel", "parallel"),
            vmem_limit_bytes=vmem_limit),
        cost_estimate=pl.CostEstimate(flops=int(flops2), transcendentals=0,
                                      bytes_accessed=int(bytes2)),
    )(fused, v_f)

    # final view: split the torch-ordered flat spatial axis as (H, W), exactly
    # like `out.view(bsz, len_s, -1, height, width)` in the PyTorch module.
    return out_flat.reshape(B, S, D, H, W)


# --------------------------------------------------------------------------
# Pure-JAX reference (mirrors the PyTorch forward op-for-op) for validation.
# --------------------------------------------------------------------------
def reference_channel_video_attention(q, k, v, params, *, heads):
    wq, wk, wv = params
    B, S, D, H, W = q.shape
    T = k.shape[1]
    dh = D // heads
    scale = float(dh) ** -0.5
    hp = jax.lax.Precision.HIGHEST

    qp = jnp.einsum('bsd,ed->bse', q.mean(axis=(-1, -2)), wq, precision=hp)
    kp = jnp.einsum('btd,ed->bte', k.mean(axis=(-1, -2)), wk, precision=hp)
    vp = jnp.transpose(v, (0, 4, 3, 1, 2)).reshape(B, H * W, T, D)
    vp = jnp.einsum('bptd,ed->bpte', vp, wv, precision=hp)              # (B,P,T,D)

    qh = qp.reshape(B, S, heads, dh).transpose(0, 2, 1, 3) * scale      # (B,h,S,dh)
    kh = kp.reshape(B, T, heads, dh).transpose(0, 2, 3, 1)              # (B,h,dh,T)
    vh = vp.reshape(B, H * W, T, heads, dh).transpose(0, 1, 3, 2, 4)    # (B,P,h,T,dh)

    attn = jax.nn.softmax(
        jnp.einsum('bhsd,bhdt->bhst', qh, kh, precision=hp), axis=-1)   # (B,h,S,T)
    out = jnp.einsum('bhst,bphtd->bphsd', attn, vh, precision=hp)       # (B,P,h,S,dh)
    out = out.transpose(0, 3, 2, 4, 1).reshape(B, S, heads * dh, H, W)
    return out


if __name__ == "__main__":
    key = jax.random.PRNGKey(0)
    kq, kk, kv, kw = jax.random.split(key, 4)

    B, S, T, DIM, HEADS, H, W = 2, 8, 8, 32, 4, 16, 16
    q = jax.random.normal(kq, (B, S, DIM, H, W), jnp.float32)
    k = jax.random.normal(kk, (B, T, DIM, H, W), jnp.float32)
    v = jax.random.normal(kv, (B, T, DIM, H, W), jnp.float32)

    kws = jax.random.split(kw, 3)
    wscale = 1.0 / (DIM ** 0.5)
    wq = wscale * jax.random.normal(kws[0], (DIM, DIM), jnp.float32)
    wk = wscale * jax.random.normal(kws[1], (DIM, DIM), jnp.float32)
    wv = wscale * jax.random.normal(kws[2], (DIM, DIM), jnp.float32)
    params = (wq, wk, wv)

    ref = reference_channel_video_attention(q, k, v, params, heads=HEADS)

    # f32 compute path: tight check against the reference.
    fwd_f32 = jax.jit(functools.partial(channel_video_attention, heads=HEADS,
                                        compute_dtype=jnp.float32))
    out_f32 = jax.block_until_ready(fwd_f32(q, k, v, params))
    assert out_f32.shape == (B, S, DIM, H, W)
    assert jnp.allclose(out_f32, ref, rtol=2e-3, atol=2e-3), "f32 mismatch vs reference"

    # bf16 compute path (default, MXU-friendly): loose check.
    fwd_bf16 = jax.jit(functools.partial(channel_video_attention, heads=HEADS))
    out_bf16 = jax.block_until_ready(fwd_bf16(q, k, v, params))
    assert out_bf16.shape == (B, S, DIM, H, W)
    assert jnp.allclose(out_bf16, ref, rtol=5e-2, atol=5e-2), "bf16 mismatch vs reference"

    print("KERNEL_OK")
</pallas_src>

<mosaic_0001>
module attributes {stable_mosaic.version = 11 : i64} {
  func.func @_attn_weights_kernel(%arg0: i32, %arg1: memref<1x8x32xf32, #tpu.memory_space<vmem>>, %arg2: memref<1x8x32xf32, #tpu.memory_space<vmem>>, %arg3: memref<32x32xf32, #tpu.memory_space<vmem>>, %arg4: memref<32x32xf32, #tpu.memory_space<vmem>>, %arg5: memref<1x4x8x8xf32, #tpu.memory_space<vmem>>) attributes {dimension_semantics = [#tpu.dimension_semantics<parallel>], iteration_bounds = array<i64: 2>, scalar_prefetch = 0 : i64, scratch_operands = 0 : i64, tpu.core_type = #tpu.core_type<tc>, window_params = [{transform_indices = @transform_0, window_bounds = array<i64: 1, 8, 32>}, {transform_indices = @transform_1, window_bounds = array<i64: 1, 8, 32>}, {pipeline_mode = #tpu.pipeline_mode<synchronous>, transform_indices = @transform_2, window_bounds = array<i64: 32, 32>}, {pipeline_mode = #tpu.pipeline_mode<synchronous>, transform_indices = @transform_3, window_bounds = array<i64: 32, 32>}, {transform_indices = @transform_4, window_bounds = array<i64: 1, 4, 8, 8>}]} {
    %c0 = arith.constant 0 : index
    %c0_0 = arith.constant 0 : index
    %c0_1 = arith.constant 0 : index
    %0 = vector.load %arg1[%c0, %c0_0, %c0_1] : memref<1x8x32xf32, #tpu.memory_space<vmem>>, vector<1x8x32xf32>
    %1 = vector.shape_cast %0 : vector<1x8x32xf32> to vector<8x32xf32>
    %c0_2 = arith.constant 0 : index
    %c0_3 = arith.constant 0 : index
    %2 = vector.load %arg3[%c0_2, %c0_3] : memref<32x32xf32, #tpu.memory_space<vmem>>, vector<32x32xf32>
    %cst = arith.constant dense<0.000000e+00> : vector<8x32xf32>
    %3 = tpu.matmul %1, %2, %cst {dimension_numbers = #tpu.dot_dimension_numbers<[1], [0], [0], [1], [0, 0, 1, 1], [], []>} : vector<8x32xf32>, vector<32x32xf32>, vector<8x32xf32> -> vector<8x32xf32>
    %cst_4 = arith.constant 0.353553385 : f32
    %4 = vector.broadcast %cst_4 : f32 to vector<8x32xf32>
    %5 = arith.mulf %3, %4 : vector<8x32xf32>
    %c0_5 = arith.constant 0 : index
    %c0_6 = arith.constant 0 : index
    %c0_7 = arith.constant 0 : index
    %6 = vector.load %arg2[%c0_5, %c0_6, %c0_7] : memref<1x8x32xf32, #tpu.memory_space<vmem>>, vector<1x8x32xf32>
    %7 = vector.shape_cast %6 : vector<1x8x32xf32> to vector<8x32xf32>
    %c0_8 = arith.constant 0 : index
    %c0_9 = arith.constant 0 : index
    %8 = vector.load %arg4[%c0_8, %c0_9] : memref<32x32xf32, #tpu.memory_space<vmem>>, vector<32x32xf32>
    %cst_10 = arith.constant dense<0.000000e+00> : vector<8x32xf32>
    %9 = tpu.matmul %7, %8, %cst_10 {dimension_numbers = #tpu.dot_dimension_numbers<[1], [0], [0], [1], [0, 0, 1, 1], [], []>} : vector<8x32xf32>, vector<32x32xf32>, vector<8x32xf32> -> vector<8x32xf32>
    %10 = vector.extract_strided_slice %5 {offsets = [0, 0], sizes = [8, 8], strides = [1, 1]} : vector<8x32xf32> to vector<8x8xf32>
    %11 = vector.extract_strided_slice %9 {offsets = [0, 0], sizes = [8, 8], strides = [1, 1]} : vector<8x32xf32> to vector<8x8xf32>
    %cst_11 = arith.constant dense<0.000000e+00> : vector<8x8xf32>
    %12 = tpu.matmul %10, %11, %cst_11 {dimension_numbers = #tpu.dot_dimension_numbers<[1], [1], [0], [0], [0, 0, 1, 0], [], []>} : vector<8x8xf32>, vector<8x8xf32>, vector<8x8xf32> -> vector<8x8xf32>
    %cst_12 = arith.constant dense<0xFF800000> : vector<8xf32>
    %13 = vector.multi_reduction <maximumf>, %12, %cst_12 [1] : vector<8x8xf32> to vector<8xf32>
    %14 = vector.shape_cast %13 : vector<8xf32> to vector<8x1xf32>
    %15 = vector.broadcast %14 : vector<8x1xf32> to vector<8x8xf32>
    %16 = arith.subf %12, %15 : vector<8x8xf32>
    %17 = math.exp %16 : vector<8x8xf32>
    %cst_13 = arith.constant dense<0.000000e+00> : vector<8xf32>
    %18 = vector.multi_reduction <add>, %17, %cst_13 [1] : vector<8x8xf32> to vector<8xf32>
    %19 = vector.shape_cast %18 : vector<8xf32> to vector<8x1xf32>
    %20 = vector.broadcast %19 : vector<8x1xf32> to vector<8x8xf32>
    %21 = arith.divf %17, %20 : vector<8x8xf32>
    %c0_14 = arith.constant 0 : index
    %c0_15 = arith.constant 0 : index
    %c0_16 = arith.constant 0 : index
    %c0_17 = arith.constant 0 : index
    %22 = vector.load %arg5[%c0_14, %c0_15, %c0_16, %c0_17] : memref<1x4x8x8xf32, #tpu.memory_space<vmem>>, vector<1x1x8x8xf32>
    %23 = vector.shape_cast %22 : vector<1x1x8x8xf32> to vector<8x8xf32>
    %24 = vector.shape_cast %21 : vector<8x8xf32> to vector<1x1x8x8xf32>
    tpu.vector_store %arg5[%c0_14, %c0_15, %c0_16, %c0_17], %24 {strides = array<i32>} : memref<1x4x8x8xf32, #tpu.memory_space<vmem>>, vector<1x1x8x8xf32>,
    %25 = vector.extract_strided_slice %5 {offsets = [0, 8], sizes = [8, 8], strides = [1, 1]} : vector<8x32xf32> to vector<8x8xf32>
    %26 = vector.extract_strided_slice %9 {offsets = [0, 8], sizes = [8, 8], strides = [1, 1]} : vector<8x32xf32> to vector<8x8xf32>
    %cst_18 = arith.constant dense<0.000000e+00> : vector<8x8xf32>
    %27 = tpu.matmul %25, %26, %cst_18 {dimension_numbers = #tpu.dot_dimension_numbers<[1], [1], [0], [0], [0, 0, 1, 0], [], []>} : vector<8x8xf32>, vector<8x8xf32>, vector<8x8xf32> -> vector<8x8xf32>
    %cst_19 = arith.constant dense<0xFF800000> : vector<8xf32>
    %28 = vector.multi_reduction <maximumf>, %27, %cst_19 [1] : vector<8x8xf32> to vector<8xf32>
    %29 = vector.shape_cast %28 : vector<8xf32> to vector<8x1xf32>
    %30 = vector.broadcast %29 : vector<8x1xf32> to vector<8x8xf32>
    %31 = arith.subf %27, %30 : vector<8x8xf32>
    %32 = math.exp %31 : vector<8x8xf32>
    %cst_20 = arith.constant dense<0.000000e+00> : vector<8xf32>
    %33 = vector.multi_reduction <add>, %32, %cst_20 [1] : vector<8x8xf32> to vector<8xf32>
    %34 = vector.shape_cast %33 : vector<8xf32> to vector<8x1xf32>
    %35 = vector.broadcast %34 : vector<8x1xf32> to vector<8x8xf32>
    %36 = arith.divf %32, %35 : vector<8x8xf32>
    %c0_21 = arith.constant 0 : index
    %c1 = arith.constant 1 : index
    %c0_22 = arith.constant 0 : index
    %c0_23 = arith.constant 0 : index
    %37 = vector.load %arg5[%c0_21, %c1, %c0_22, %c0_23] : memref<1x4x8x8xf32, #tpu.memory_space<vmem>>, vector<1x1x8x8xf32>
    %38 = vector.shape_cast %37 : vector<1x1x8x8xf32> to vector<8x8xf32>
    %39 = vector.shape_cast %36 : vector<8x8xf32> to vector<1x1x8x8xf32>
    tpu.vector_store %arg5[%c0_21, %c1, %c0_22, %c0_23], %39 {strides = array<i32>} : memref<1x4x8x8xf32, #tpu.memory_space<vmem>>, vector<1x1x8x8xf32>,
    %40 = vector.extract_strided_slice %5 {offsets = [0, 16], sizes = [8, 8], strides = [1, 1]} : vector<8x32xf32> to vector<8x8xf32>
    %41 = vector.extract_strided_slice %9 {offsets = [0, 16], sizes = [8, 8], strides = [1, 1]} : vector<8x32xf32> to vector<8x8xf32>
    %cst_24 = arith.constant dense<0.000000e+00> : vector<8x8xf32>
    %42 = tpu.matmul %40, %41, %cst_24 {dimension_numbers = #tpu.dot_dimension_numbers<[1], [1], [0], [0], [0, 0, 1, 0], [], []>} : vector<8x8xf32>, vector<8x8xf32>, vector<8x8xf32> -> vector<8x8xf32>
    %cst_25 = arith.constant dense<0xFF800000> : vector<8xf32>
    %43 = vector.multi_reduction <maximumf>, %42, %cst_25 [1] : vector<8x8xf32> to vector<8xf32>
    %44 = vector.shape_cast %43 : vector<8xf32> to vector<8x1xf32>
    %45 = vector.broadcast %44 : vector<8x1xf32> to vector<8x8xf32>
    %46 = arith.subf %42, %45 : vector<8x8xf32>
    %47 = math.exp %46 : vector<8x8xf32>
    %cst_26 = arith.constant dense<0.000000e+00> : vector<8xf32>
    %48 = vector.multi_reduction <add>, %47, %cst_26 [1] : vector<8x8xf32> to vector<8xf32>
    %49 = vector.shape_cast %48 : vector<8xf32> to vector<8x1xf32>
    %50 = vector.broadcast %49 : vector<8x1xf32> to vector<8x8xf32>
    %51 = arith.divf %47, %50 : vector<8x8xf32>
    %c0_27 = arith.constant 0 : index
    %c2 = arith.constant 2 : index
    %c0_28 = arith.constant 0 : index
    %c0_29 = arith.constant 0 : index
    %52 = vector.load %arg5[%c0_27, %c2, %c0_28, %c0_29] : memref<1x4x8x8xf32, #tpu.memory_space<vmem>>, vector<1x1x8x8xf32>
    %53 = vector.shape_cast %52 : vector<1x1x8x8xf32> to vector<8x8xf32>
    %54 = vector.shape_cast %51 : vector<8x8xf32> to vector<1x1x8x8xf32>
    tpu.vector_store %arg5[%c0_27, %c2, %c0_28, %c0_29], %54 {strides = array<i32>} : memref<1x4x8x8xf32, #tpu.memory_space<vmem>>, vector<1x1x8x8xf32>,
    %55 = vector.extract_strided_slice %5 {offsets = [0, 24], sizes = [8, 8], strides = [1, 1]} : vector<8x32xf32> to vector<8x8xf32>
    %56 = vector.extract_strided_slice %9 {offsets = [0, 24], sizes = [8, 8], strides = [1, 1]} : vector<8x32xf32> to vector<8x8xf32>
    %cst_30 = arith.constant dense<0.000000e+00> : vector<8x8xf32>
    %57 = tpu.matmul %55, %56, %cst_30 {dimension_numbers = #tpu.dot_dimension_numbers<[1], [1], [0], [0], [0, 0, 1, 0], [], []>} : vector<8x8xf32>, vector<8x8xf32>, vector<8x8xf32> -> vector<8x8xf32>
    %cst_31 = arith.constant dense<0xFF800000> : vector<8xf32>
    %58 = vector.multi_reduction <maximumf>, %57, %cst_31 [1] : vector<8x8xf32> to vector<8xf32>
    %59 = vector.shape_cast %58 : vector<8xf32> to vector<8x1xf32>
    %60 = vector.broadcast %59 : vector<8x1xf32> to vector<8x8xf32>
    %61 = arith.subf %57, %60 : vector<8x8xf32>
    %62 = math.exp %61 : vector<8x8xf32>
    %cst_32 = arith.constant dense<0.000000e+00> : vector<8xf32>
    %63 = vector.multi_reduction <add>, %62, %cst_32 [1] : vector<8x8xf32> to vector<8xf32>
    %64 = vector.shape_cast %63 : vector<8xf32> to vector<8x1xf32>
    %65 = vector.broadcast %64 : vector<8x1xf32> to vector<8x8xf32>
    %66 = arith.divf %62, %65 : vector<8x8xf32>
    %c0_33 = arith.constant 0 : index
    %c3 = arith.constant 3 : index
    %c0_34 = arith.constant 0 : index
    %c0_35 = arith.constant 0 : index
    %67 = vector.load %arg5[%c0_33, %c3, %c0_34, %c0_35] : memref<1x4x8x8xf32, #tpu.memory_space<vmem>>, vector<1x1x8x8xf32>
    %68 = vector.shape_cast %67 : vector<1x1x8x8xf32> to vector<8x8xf32>
    %69 = vector.shape_cast %66 : vector<8x8xf32> to vector<1x1x8x8xf32>
    tpu.vector_store %arg5[%c0_33, %c3, %c0_34, %c0_35], %69 {strides = array<i32>} : memref<1x4x8x8xf32, #tpu.memory_space<vmem>>, vector<1x1x8x8xf32>,
    return
  }
  func.func @transform_0(%arg0: i32) -> (i32, i32, i32) {
    %c0_i32 = arith.constant 0 : i32
    %c0_i32_0 = arith.constant 0 : i32
    %c0_i32_1 = arith.constant 0 : i32
    return %arg0, %c0_i32, %c0_i32_0 : i32, i32, i32
  }
  func.func @transform_1(%arg0: i32) -> (i32, i32, i32) {
    %c0_i32 = arith.constant 0 : i32
    %c0_i32_0 = arith.constant 0 : i32
    %c0_i32_1 = arith.constant 0 : i32
    return %arg0, %c0_i32, %c0_i32_0 : i32, i32, i32
  }
  func.func @transform_2(%arg0: i32) -> (i32, i32) {
    %c0_i32 = arith.constant 0 : i32
    %c0_i32_0 = arith.constant 0 : i32
    %c0_i32_1 = arith.constant 0 : i32
    return %c0_i32, %c0_i32_0 : i32, i32
  }
  func.func @transform_3(%arg0: i32) -> (i32, i32) {
    %c0_i32 = arith.constant 0 : i32
    %c0_i32_0 = arith.constant 0 : i32
    %c0_i32_1 = arith.constant 0 : i32
    return %c0_i32, %c0_i32_0 : i32, i32
  }
  func.func @transform_4(%arg0: i32) -> (i32, i32, i32, i32) {
    %c0_i32 = arith.constant 0 : i32
    %c0_i32_0 = arith.constant 0 : i32
    %c0_i32_1 = arith.constant 0 : i32
    %c0_i32_2 = arith.constant 0 : i32
    return %arg0, %c0_i32, %c0_i32_0, %c0_i32_1 : i32, i32, i32, i32
  }
}

module attributes {stable_mosaic.version = 11 : i64} {
  func.func @_fused_apply_kernel(%arg0: i32, %arg1: i32, %arg2: memref<1x256x256xf32, #tpu.memory_space<vmem>>, %arg3: memref<1x256x256xf32, #tpu.memory_space<vmem>>, %arg4: memref<1x256x256xf32, #tpu.memory_space<vmem>>) attributes {dimension_semantics = [#tpu.dimension_semantics<parallel>, #tpu.dimension_semantics<parallel>], iteration_bounds = array<i64: 2, 1>, scalar_prefetch = 0 : i64, scratch_operands = 0 : i64, tpu.core_type = #tpu.core_type<tc>, window_params = [{transform_indices = @transform_0, window_bounds = array<i64: 1, 256, 256>}, {transform_indices = @transform_1, window_bounds = array<i64: 1, 256, 256>}, {transform_indices = @transform_2, window_bounds = array<i64: 1, 256, 256>}]} {
    %c0 = arith.constant 0 : index
    %c0_0 = arith.constant 0 : index
    %c0_1 = arith.constant 0 : index
    %0 = vector.load %arg2[%c0, %c0_0, %c0_1] : memref<1x256x256xf32, #tpu.memory_space<vmem>>, vector<1x256x256xf32>
    %1 = vector.shape_cast %0 : vector<1x256x256xf32> to vector<256x256xf32>
    %c0_2 = arith.constant 0 : index
    %c0_3 = arith.constant 0 : index
    %c0_4 = arith.constant 0 : index
    %2 = vector.load %arg3[%c0_2, %c0_3, %c0_4] : memref<1x256x256xf32, #tpu.memory_space<vmem>>, vector<1x256x256xf32>
    %3 = vector.shape_cast %2 : vector<1x256x256xf32> to vector<256x256xf32>
    %cst = arith.constant dense<0.000000e+00> : vector<256x256xf32>
    %4 = tpu.matmul %1, %3, %cst {dimension_numbers = #tpu.dot_dimension_numbers<[1], [0], [0], [1], [0, 0, 1, 1], [], []>} : vector<256x256xf32>, vector<256x256xf32>, vector<256x256xf32> -> vector<256x256xf32>
    %c0_5 = arith.constant 0 : index
    %c0_6 = arith.constant 0 : index
    %c0_7 = arith.constant 0 : index
    %5 = vector.load %arg4[%c0_5, %c0_6, %c0_7] : memref<1x256x256xf32, #tpu.memory_space<vmem>>, vector<1x256x256xf32>
    %6 = vector.shape_cast %5 : vector<1x256x256xf32> to vector<256x256xf32>
    %7 = vector.shape_cast %4 : vector<256x256xf32> to vector<1x256x256xf32>
    tpu.vector_store %arg4[%c0_5, %c0_6, %c0_7], %7 {strides = array<i32>} : memref<1x256x256xf32, #tpu.memory_space<vmem>>, vector<1x256x256xf32>,
    return
  }
  func.func @transform_0(%arg0: i32, %arg1: i32) -> (i32, i32, i32) {
    %c0_i32 = arith.constant 0 : i32
    %c0_i32_0 = arith.constant 0 : i32
    %c0_i32_1 = arith.constant 0 : i32
    return %arg0, %c0_i32, %c0_i32_0 : i32, i32, i32
  }
  func.func @transform_1(%arg0: i32, %arg1: i32) -> (i32, i32, i32) {
    %c0_i32 = arith.constant 0 : i32
    %c0_i32_0 = arith.constant 0 : i32
    return %arg0, %c0_i32, %arg1 : i32, i32, i32
  }
  func.func @transform_2(%arg0: i32, %arg1: i32) -> (i32, i32, i32) {
    %c0_i32 = arith.constant 0 : i32
    %c0_i32_0 = arith.constant 0 : i32
    return %arg0, %c0_i32, %arg1 : i32, i32, i32
  }
}

</mosaic_0001>

<llo_original>
// kernel: channel_video_attention.2
$region0: #{channel_video_attention.2}
  #allocation0 [shape = 'u32[]', space=smem, size = 0x4, offset = 0x4, fixed_abs, tag = 'smem constant byte address 0x4 - core index']
  #allocation1 [shape = 'u32[144,128]{1,0:T(1,128)}', space=vmem, size = 0x12000, scoped, tag = 'internal scratch']
  %s0 = inlined_call_operand.vmem [shape: f32[2,8,32], index: 0, kind: input, shape index: {}]
  %s1 = inlined_call_operand.vmem [shape: f32[2,8,32], index: 1, kind: input, shape index: {}]
  %s2 = inlined_call_operand.vmem [shape: f32[32,32], index: 2, kind: input, shape index: {}]
  %s3 = inlined_call_operand.vmem [shape: f32[32,32], index: 3, kind: input, shape index: {}]
  %s4 = inlined_call_operand.vmem [shape: f32[2,4,8,8], index: 4, kind: output, shape index: {}]
  %s5 = sld [smem:[#allocation0]]
  $region49: #{channel_video_attention.2} parent=0
    _
  %s7 = ssub.s32 1, %s5
  %s8 = scalar_select 0, %s7, %s5
  loop: start=0, step=1, limit=4
  $region2: #{channel_video_attention.2} parent=0 // loop_pre_header
    _
  $region3: #{channel_video_attention.2} parent=0 // loop_header
    %s10 = sphi 0, %s14
    %p11 = scmp.ge.s32.totalorder %s10, 4
    %s20 = sphi 0, %s22
    %s23 = sphi 0, %s20
    %s24 = sphi 0, %s23
    %s40 = sphi 0, %s24
    %s46 = sphi 0, %s48
    %s49 = sphi 0, %s46
    %s50 = sphi 0, %s49
    %s66 = sphi 0, %s50
    %s70 = sphi 0, %s70
    %s72 = sphi 0, %s70
    %s73 = sphi 0, %s72
    %s87 = sphi 0, %s73
    %s91 = sphi 0, %s91
    %s93 = sphi 0, %s91
    %s94 = sphi 0, %s93
    %s108 = sphi 0, %s94
    %s114 = sphi 0, %s116
    %s117 = sphi 0, %s114
    %s118 = sphi 0, %s117
    %s134 = sphi 0, %s118
  $region4: #{channel_video_attention.2} parent=0 // loop_header_branch
    %13 = sbr.rel (%p11) target = $region8
  $region5: #{channel_video_attention.2} parent=0 // loop_body
    %s15 = ssub.s32 %s10, 1
    %s16 = ssub.s32 %s10, 2
    %s17 = sadd.s32 %s10, 1
    %s18 = ssub.s32 %s10, %s17
    %p19 = scmp.eq.s32.totalorder %s18, 0
    %s21 = sadd.s32 %s20, 1
    %s22 = scalar_select %p19, %s20, %s21
    %p25 = pneg %p19
    %p26 = scmp.eq.s32.totalorder %s10, 1
    %p27 = por %p25, %p26
    %p28 = scmp.ne.s32.totalorder %s20, %s23
    %p29 = scmp.eq.s32.totalorder %s10, 0
    %p30 = por %p28, %p29
    %p31 = scmp.ne.s32.totalorder %s20, %s23
    %p32 = scmp.eq.s32.totalorder %s15, 1
    %p33 = por %p31, %p32
    %p34 = scmp.ne.s32.totalorder %s23, %s24
    %p35 = scmp.eq.s32.totalorder %s15, 0
    %p36 = por %p34, %p35
    %p37 = scmp.ne.s32.totalorder %s23, %s24
    %p38 = scmp.eq.s32.totalorder %s16, 1
    %p39 = por %p37, %p38
    %p41 = scmp.ne.s32.totalorder %s24, %s40
    %p42 = scmp.eq.s32.totalorder %s16, 0
    %p43 = por %p41, %p42
    %s44 = ssub.s32 %s10, %s17
    %p45 = scmp.eq.s32.totalorder %s44, 0
    %s47 = sadd.s32 %s46, 1
    %s48 = scalar_select %p45, %s46, %s47
    %p51 = pneg %p45
    %p52 = scmp.eq.s32.totalorder %s10, 1
    %p53 = por %p51, %p52
    %p54 = scmp.ne.s32.totalorder %s46, %s49
    %p55 = scmp.eq.s32.totalorder %s10, 0
    %p56 = por %p54, %p55
    %p57 = scmp.ne.s32.totalorder %s46, %s49
    %p58 = scmp.eq.s32.totalorder %s15, 1
    %p59 = por %p57, %p58
    %p60 = scmp.ne.s32.totalorder %s49, %s50
    %p61 = scmp.eq.s32.totalorder %s15, 0
    %p62 = por %p60, %p61
    %p63 = scmp.ne.s32.totalorder %s49, %s50
    %p64 = scmp.eq.s32.totalorder %s16, 1
    %p65 = por %p63, %p64
    %p67 = scmp.ne.s32.totalorder %s50, %s66
    %p68 = scmp.eq.s32.totalorder %s16, 0
    %p69 = por %p67, %p68
    %s71 = sadd.s32 %s70, 1
    %p74 = scmp.eq.s32.totalorder %s10, 1
    %p75 = scmp.ne.s32.totalorder %s70, %s72
    %p76 = scmp.eq.s32.totalorder %s10, 0
    %p77 = por %p75, %p76
    %p78 = scmp.ne.s32.totalorder %s70, %s72
    %p79 = scmp.eq.s32.totalorder %s15, 1
    %p80 = por %p78, %p79
    %p81 = scmp.ne.s32.totalorder %s72, %s73
    %p82 = scmp.eq.s32.totalorder %s15, 0
    %p83 = por %p81, %p82
    %p84 = scmp.ne.s32.totalorder %s72, %s73
    %p85 = scmp.eq.s32.totalorder %s16, 1
    %p86 = por %p84, %p85
    %p88 = scmp.ne.s32.totalorder %s73, %s87
    %p89 = scmp.eq.s32.totalorder %s16, 0
    %p90 = por %p88, %p89
    %s92 = sadd.s32 %s91, 1
    %p95 = scmp.eq.s32.totalorder %s10, 1
    %p96 = scmp.ne.s32.totalorder %s91, %s93
    %p97 = scmp.eq.s32.totalorder %s10, 0
    %p98 = por %p96, %p97
    %p99 = scmp.ne.s32.totalorder %s91, %s93
    %p100 = scmp.eq.s32.totalorder %s15, 1
    %p101 = por %p99, %p100
    %p102 = scmp.ne.s32.totalorder %s93, %s94
    %p103 = scmp.eq.s32.totalorder %s15, 0
    %p104 = por %p102, %p103
    %p105 = scmp.ne.s32.totalorder %s93, %s94
    %p106 = scmp.eq.s32.totalorder %s16, 1
    %p107 = por %p105, %p106
    %p109 = scmp.ne.s32.totalorder %s94, %s108
    %p110 = scmp.eq.s32.totalorder %s16, 0
    %p111 = por %p109, %p110
    %s112 = ssub.s32 %s10, %s17
    %p113 = scmp.eq.s32.totalorder %s112, 0
    %s115 = sadd.s32 %s114, 1
    %s116 = scalar_select %p113, %s114, %s115
    %p119 = pneg %p113
    %p120 = scmp.eq.s32.totalorder %s10, 1
    %p121 = por %p119, %p120
    %p122 = scmp.ne.s32.totalorder %s114, %s117
    %p123 = scmp.eq.s32.totalorder %s10, 0
    %p124 = por %p122, %p123
    %p125 = scmp.ne.s32.totalorder %s114, %s117
    %p126 = scmp.eq.s32.totalorder %s15, 1
    %p127 = por %p125, %p126
    %p128 = scmp.ne.s32.totalorder %s117, %s118
    %p129 = scmp.eq.s32.totalorder %s15, 0
    %p130 = por %p128, %p129
    %p131 = scmp.ne.s32.totalorder %s117, %s118
    %p132 = scmp.eq.s32.totalorder %s16, 1
    %p133 = por %p131, %p132
    %p135 = scmp.ne.s32.totalorder %s118, %s134
    %p136 = scmp.eq.s32.totalorder %s16, 0
    %p137 = por %p135, %p136
    %p138 = scmp.le.s32.totalorder 1, %s10
    %p139 = scmp.lt.s32.totalorder %s10, 3
    %p140 = pnand %p138, %p139
    %p141 = pneg %p140
    // Predicated region
    $region9: #{channel_video_attention.2} parent=5 // pred_check
      _
    $region10: #{channel_video_attention.2} parent=5 // pred_check_branch
      %143 = sbr.rel (%p140) target = $region12
    $region11: #{channel_video_attention.2} parent=5 // pred_region
      %s144 = ssub.s32 %s10, 1
      // Predicated region
      $region13: #{channel_video_attention.2} parent=11 // pred_check
        %p145 = pneg %p83
      $region14: #{channel_video_attention.2} parent=11 // pred_check_branch
        %147 = sbr.rel (%p145) target = $region16
      $region15: #{channel_video_attention.2} parent=11 // pred_region
        _
      $region16: #{channel_video_attention.2} parent=11 // pred_fallthru
        _
      // Predicated region
      $region17: #{channel_video_attention.2} parent=11 // pred_check
        %p148 = pneg %p104
      $region18: #{channel_video_attention.2} parent=11 // pred_check_branch
        %150 = sbr.rel (%p148) target = $region20
      $region19: #{channel_video_attention.2} parent=11 // pred_region
        _
      $region20: #{channel_video_attention.2} parent=11 // pred_fallthru
        _
    $region12: #{channel_video_attention.2} parent=5 // pred_fallthru
      _
    %p151 = scmp.lt.s32.totalorder %s10, 2
    // Predicated region
    $region21: #{channel_video_attention.2} parent=5 // pred_check
      %p152 = pneg %p151
    $region22: #{channel_video_attention.2} parent=5 // pred_check_branch
      %154 = sbr.rel (%p152) target = $region24
    $region23: #{channel_video_attention.2} parent=5 // pred_region
      // Predicated region
      $region25: #{channel_video_attention.2} parent=23 // pred_check
        %p155 = pneg %p30
      $region26: #{channel_video_attention.2} parent=23 // pred_check_branch
        %157 = sbr.rel (%p155) target = $region28
      $region27: #{channel_video_attention.2} parent=23 // pred_region
        %p158 = scmp.lt.s32.totalorder %s10, 1
        %s159 = scalar_select %p158, %s10, 1
        %s160 = smul.addr %s159, 8
        %s161 = scalar_lea.vmem %s0, %s160
      $region28: #{channel_video_attention.2} parent=23 // pred_fallthru
        _
      // Predicated region
      $region29: #{channel_video_attention.2} parent=23 // pred_check
        %p162 = pneg %p56
      $region30: #{channel_video_attention.2} parent=23 // pred_check_branch
        %164 = sbr.rel (%p162) target = $region32
      $region31: #{channel_video_attention.2} parent=23 // pred_region
        %p165 = scmp.lt.s32.totalorder %s10, 1
        %s166 = scalar_select %p165, %s10, 1
        %s167 = smul.addr %s166, 8
        %s168 = scalar_lea.vmem %s1, %s167
      $region32: #{channel_video_attention.2} parent=23 // pred_fallthru
        _
    $region24: #{channel_video_attention.2} parent=5 // pred_fallthru
      _
    %p169 = scmp.le.s32.totalorder 1, %s10
    %p170 = scmp.lt.s32.totalorder %s10, 3
    %p171 = pnand %p169, %p170
    %p172 = pneg %p171
    // Predicated region
    $region33: #{channel_video_attention.2} parent=5 // pred_check
      _
    $region34: #{channel_video_attention.2} parent=5 // pred_check_branch
      %174 = sbr.rel (%p171) target = $region36
    $region35: #{channel_video_attention.2} parent=5 // pred_region
      %s175 = ssub.s32 %s10, 1
      %p176 = scmp.lt.s32.totalorder %s15, 1
      %s177 = scalar_select %p176, %s15, 1
      %s178 = smul.addr %s177, 8
      %s179 = scalar_lea.vmem %s0, %s178
      %p180 = pneg %p36
      %p181 = pneg %p33
      %p182 = scmp.lt.s32.totalorder %s15, 1
      %s183 = scalar_select %p182, %s15, 1
      %s184 = smul.addr %s183, 8
      %s185 = scalar_lea.vmem %s1, %s184
      %p186 = pneg %p62
      %p187 = pneg %p59
      %p188 = pneg %p83
      %p189 = pneg %p80
      %p190 = pneg %p104
      %p191 = pneg %p101
      %p192 = pneg %p130
      %p193 = pneg %p127
      %p194 = scmp.lt.s32.totalorder %s15, 1
      %s195 = scalar_select %p194, %s15, 1
      %s196 = smul.addr %s195, 4
      %s197 = smul.addr %s196, 8
      %s198 = scalar_lea.vmem %s4, %s197
      %p199 = scmp.lt.s32.totalorder %s15, 1
      %s200 = scalar_select %p199, %s15, 1
      %s201 = smul.addr %s200, 8
      %s202 = scalar_lea.vmem %s0, %s201
      %p203 = scmp.lt.s32.totalorder %s15, 1
      %s204 = scalar_select %p203, %s15, 1
      %s205 = smul.addr %s204, 8
      %s206 = scalar_lea.vmem %s1, %s205
      %p207 = scmp.lt.s32.totalorder %s15, 1
      %s208 = scalar_select %p207, %s15, 1
      %s209 = smul.addr %s208, 4
      %s210 = smul.addr %s209, 8
      %s211 = scalar_lea.vmem %s4, %s210
      %v212 = vld [vmem:[%s202] sm:$0xff]
      %v213 = vld [vmem:[%s2] sm:$0xff]
      %v214 = vld [vmem:[%s2 + $0x8] sm:$0xff]
      %v215 = vld [vmem:[%s2 + $0x10] sm:$0xff]
      %v216 = vld [vmem:[%s2 + $0x18] sm:$0xff]
      %vm217 = vcmask 261120
      %v219 = vsel %vm217, %v212, 0
      %221 = vmatprep.subr.mxu0 0.0
      %222 = vmatpush1.msra.mxu0 0.0
      %223 = vmatprep.subr.mxu0 0.0
      %224 = vmatpush1.msra.mxu0 0.0
      %225 = vmatprep.subr.mxu0 0.0
      %226 = vmatpush1.msra.mxu0 0.0
      %227 = vmatprep.subr.mxu0 0.0
      %228 = vmatpush1.msra.mxu0 0.0
      %229 = vmatprep.subr.mxu0 0.0
      %230 = vmatpush1.msra.mxu0 0.0
      %231 = vmatprep.subr.mxu0 0.0
      %232 = vmatpush1.msra.mxu0 0.0
      %233 = vmatprep.subr.mxu0 0.0
      %234 = vmatpush1.msra.mxu0 0.0
      %235 = vmatprep.subr.mxu0 0.0
      %236 = vmatpush1.msra.mxu0 0.0
      %237 = vmatprep.subr.mxu0 0.0
      %238 = vmatpush1.msra.mxu0 0.0
      %239 = vmatprep.subr.mxu0 0.0
      %240 = vmatpush1.msra.mxu0 0.0
      %241 = vmatprep.subr.mxu0 0.0
      %242 = vmatpush1.msra.mxu0 0.0
      %243 = vmatprep.subr.mxu0 0.0
      %244 = vmatpush1.msra.mxu0 0.0
      %245 = vmatprep.subr.mxu0 0.0
      %246 = vmatpush1.msra.mxu0 %v216
      %247 = vmatprep.subr.mxu0 0.0
      %248 = vmatpush1.msra.mxu0 %v215
      %249 = vmatprep.subr.mxu0 0.0
      %250 = vmatpush1.msra.mxu0 %v214
      %251 = vmatprep.subr.mxu0 0.0
      %252 = vmatpush1.msra.mxu0 %v213
      %253 = vmatprep.subr.mxu0 0.0
      %254 = vmatpush2.msra.mxu0 0.0
      %255 = vmatprep.subr.mxu0 0.0
      %256 = vmatpush2.msra.mxu0 0.0
      %257 = vmatprep.subr.mxu0 0.0
      %258 = vmatpush2.msra.mxu0 0.0
      %259 = vmatprep.subr.mxu0 0.0
      %260 = vmatpush2.msra.mxu0 0.0
      %261 = vmatprep.subr.mxu0 0.0
      %262 = vmatpush2.msra.mxu0 0.0
      %263 = vmatprep.subr.mxu0 0.0
      %264 = vmatpush2.msra.mxu0 0.0
      %265 = vmatprep.subr.mxu0 0.0
      %266 = vmatpush2.msra.mxu0 0.0
      %267 = vmatprep.subr.mxu0 0.0
      %268 = vmatpush2.msra.mxu0 0.0
      %269 = vmatprep.subr.mxu0 0.0
      %270 = vmatpush2.msra.mxu0 0.0
      %271 = vmatprep.subr.mxu0 0.0
      %272 = vmatpush2.msra.mxu0 0.0
      %273 = vmatprep.subr.mxu0 0.0
      %274 = vmatpush2.msra.mxu0 0.0
      %275 = vmatprep.subr.mxu0 0.0
      %276 = vmatpush2.msra.mxu0 0.0
      %277 = vmatprep.subr.mxu0 0.0
      %278 = vmatpush2.msra.mxu0 0.0
      %279 = vmatprep.subr.mxu0 0.0
      %280 = vmatpush2.msra.mxu0 0.0
      %281 = vmatprep.subr.mxu0 0.0
      %282 = vmatpush2.msra.mxu0 0.0
      %283 = vmatprep.subr.mxu0 0.0
      %284 = vmatpush2.msra.mxu0 0.0
      %285 = vmatprep.mubr.f32.mxu0 0.0
      %286 = vmatmul.mubr.f32.gmra.mxu0 %v219
      %v287 = vpop.f32.mrf.mxu0
      %v288 = vadd.f32 0.0, %v287
      %v289 = vpop.f32.mrf.mxu0
      %290 = vdwg.mxu0
      %v291 = vmul.f32 %v288, 0.35355338
      %v292 = vld [vmem:[%s206] sm:$0xff]
      %v293 = vld [vmem:[%s3] sm:$0xff]
      %v294 = vld [vmem:[%s3 + $0x8] sm:$0xff]
      %v295 = vld [vmem:[%s3 + $0x10] sm:$0xff]
      %v296 = vld [vmem:[%s3 + $0x18] sm:$0xff]
      %v298 = vsel %vm217, %v292, 0
      %300 = vmatprep.subr.mxu0 0.0
      %301 = vmatpush1.msra.mxu0 0.0
      %302 = vmatprep.subr.mxu0 0.0
      %303 = vmatpush1.msra.mxu0 0.0
      %304 = vmatprep.subr.mxu0 0.0
      %305 = vmatpush1.msra.mxu0 0.0
      %306 = vmatprep.subr.mxu0 0.0
      %307 = vmatpush1.msra.mxu0 0.0
      %308 = vmatprep.subr.mxu0 0.0
      %309 = vmatpush1.msra.mxu0 0.0
      %310 = vmatprep.subr.mxu0 0.0
      %311 = vmatpush1.msra.mxu0 0.0
      %312 = vmatprep.subr.mxu0 0.0
      %313 = vmatpush1.msra.mxu0 0.0
      %314 = vmatprep.subr.mxu0 0.0
      %315 = vmatpush1.msra.mxu0 0.0
      %316 = vmatprep.subr.mxu0 0.0
      %317 = vmatpush1.msra.mxu0 0.0
      %318 = vmatprep.subr.mxu0 0.0
      %319 = vmatpush1.msra.mxu0 0.0
      %320 = vmatprep.subr.mxu0 0.0
      %321 = vmatpush1.msra.mxu0 0.0
      %322 = vmatprep.subr.mxu0 0.0
      %323 = vmatpush1.msra.mxu0 0.0
      %324 = vmatprep.subr.mxu0 0.0
      %325 = vmatpush1.msra.mxu0 %v296
      %326 = vmatprep.subr.mxu0 0.0
      %327 = vmatpush1.msra.mxu0 %v295
      %328 = vmatprep.subr.mxu0 0.0
      %329 = vmatpush1.msra.mxu0 %v294
      %330 = vmatprep.subr.mxu0 0.0
      %331 = vmatpush1.msra.mxu0 %v293
      %332 = vmatprep.subr.mxu0 0.0
      %333 = vmatpush2.msra.mxu0 0.0
      %334 = vmatprep.subr.mxu0 0.0
      %335 = vmatpush2.msra.mxu0 0.0
      %336 = vmatprep.subr.mxu0 0.0
      %337 = vmatpush2.msra.mxu0 0.0
      %338 = vmatprep.subr.mxu0 0.0
      %339 = vmatpush2.msra.mxu0 0.0
      %340 = vmatprep.subr.mxu0 0.0
      %341 = vmatpush2.msra.mxu0 0.0
      %342 = vmatprep.subr.mxu0 0.0
      %343 = vmatpush2.msra.mxu0 0.0
      %344 = vmatprep.subr.mxu0 0.0
      %345 = vmatpush2.msra.mxu0 0.0
      %346 = vmatprep.subr.mxu0 0.0
      %347 = vmatpush2.msra.mxu0 0.0
      %348 = vmatprep.subr.mxu0 0.0
      %349 = vmatpush2.msra.mxu0 0.0
      %350 = vmatprep.subr.mxu0 0.0
      %351 = vmatpush2.msra.mxu0 0.0
      %352 = vmatprep.subr.mxu0 0.0
      %353 = vmatpush2.msra.mxu0 0.0
      %354 = vmatprep.subr.mxu0 0.0
      %355 = vmatpush2.msra.mxu0 0.0
      %356 = vmatprep.subr.mxu0 0.0
      %357 = vmatpush2.msra.mxu0 0.0
      %358 = vmatprep.subr.mxu0 0.0
      %359 = vmatpush2.msra.mxu0 0.0
      %360 = vmatprep.subr.mxu0 0.0
      %361 = vmatpush2.msra.mxu0 0.0
      %362 = vmatprep.subr.mxu0 0.0
      %363 = vmatpush2.msra.mxu0 0.0
      %364 = vmatprep.mubr.f32.mxu0 0.0
      %365 = vmatmul.mubr.f32.gmra.mxu0 %v298
      %v366 = vpop.f32.mrf.mxu0
      %v367 = vadd.f32 0.0, %v366
      %v368 = vpop.f32.mrf.mxu0
      %369 = vdwg.mxu0
      %vm370 = vcmask 64512
      %v372 = vsel %vm370, %v291, 0
      %v375 = vsel %vm370, %v367, 0
      %377 = vmatprep.subr.mxu0 0.0
      %378 = vmatpush1.xpose.msra.mxu0 0.0
      %379 = vmatprep.subr.mxu0 0.0
      %380 = vmatpush1.xpose.msra.mxu0 0.0
      %381 = vmatprep.subr.mxu0 0.0
      %382 = vmatpush1.xpose.msra.mxu0 0.0
      %383 = vmatprep.subr.mxu0 0.0
      %384 = vmatpush1.xpose.msra.mxu0 0.0
      %385 = vmatprep.subr.mxu0 0.0
      %386 = vmatpush1.xpose.msra.mxu0 0.0
      %387 = vmatprep.subr.mxu0 0.0
      %388 = vmatpush1.xpose.msra.mxu0 0.0
      %389 = vmatprep.subr.mxu0 0.0
      %390 = vmatpush1.xpose.msra.mxu0 0.0
      %391 = vmatprep.subr.mxu0 0.0
      %392 = vmatpush1.xpose.msra.mxu0 0.0
      %393 = vmatprep.subr.mxu0 0.0
      %394 = vmatpush1.xpose.msra.mxu0 0.0
      %395 = vmatprep.subr.mxu0 0.0
      %396 = vmatpush1.xpose.msra.mxu0 0.0
      %397 = vmatprep.subr.mxu0 0.0
      %398 = vmatpush1.xpose.msra.mxu0 0.0
      %399 = vmatprep.subr.mxu0 0.0
      %400 = vmatpush1.xpose.msra.mxu0 0.0
      %401 = vmatprep.subr.mxu0 0.0
      %402 = vmatpush1.xpose.msra.mxu0 0.0
      %403 = vmatprep.subr.mxu0 0.0
      %404 = vmatpush1.xpose.msra.mxu0 0.0
      %405 = vmatprep.subr.mxu0 0.0
      %406 = vmatpush1.xpose.msra.mxu0 0.0
      %407 = vmatprep.subr.mxu0 0.0
      %408 = vmatpush1.xpose.msra.mxu0 %v375
      %409 = vmatprep.subr.mxu0 0.0
      %410 = vmatpush2.xpose.msra.mxu0 0.0
      %411 = vmatprep.subr.mxu0 0.0
      %412 = vmatpush2.xpose.msra.mxu0 0.0
      %413 = vmatprep.subr.mxu0 0.0
      %414 = vmatpush2.xpose.msra.mxu0 0.0
      %415 = vmatprep.subr.mxu0 0.0
      %416 = vmatpush2.xpose.msra.mxu0 0.0
      %417 = vmatprep.subr.mxu0 0.0
      %418 = vmatpush2.xpose.msra.mxu0 0.0
      %419 = vmatprep.subr.mxu0 0.0
      %420 = vmatpush2.xpose.msra.mxu0 0.0
      %421 = vmatprep.subr.mxu0 0.0
      %422 = vmatpush2.xpose.msra.mxu0 0.0
      %423 = vmatprep.subr.mxu0 0.0
      %424 = vmatpush2.xpose.msra.mxu0 0.0
      %425 = vmatprep.subr.mxu0 0.0
      %426 = vmatpush2.xpose.msra.mxu0 0.0
      %427 = vmatprep.subr.mxu0 0.0
      %428 = vmatpush2.xpose.msra.mxu0 0.0
      %429 = vmatprep.subr.mxu0 0.0
      %430 = vmatpush2.xpose.msra.mxu0 0.0
      %431 = vmatprep.subr.mxu0 0.0
      %432 = vmatpush2.xpose.msra.mxu0 0.0
      %433 = vmatprep.subr.mxu0 0.0
      %434 = vmatpush2.xpose.msra.mxu0 0.0
      %435 = vmatprep.subr.mxu0 0.0
      %436 = vmatpush2.xpose.msra.mxu0 0.0
      %437 = vmatprep.subr.mxu0 0.0
      %438 = vmatpush2.xpose.msra.mxu0 0.0
      %439 = vmatprep.subr.mxu0 0.0
      %440 = vmatpush2.xpose.msra.mxu0 0.0
      %441 = vmatprep.mubr.f32.mxu0 0.0
      %442 = vmatmul.mubr.f32.gmra.mxu0 %v372
      %v443 = vpop.f32.mrf.mxu0
      %v444 = vadd.f32 0.0, %v443
      %v445 = vpop.f32.mrf.mxu0
      %446 = vdwg.mxu0
      %v447 = vsel %vm370, %v444, -inf
      %448 = vmax.xlane.f32.xlu0 %v447
      %v449 = vpop.xlane.xlu0 %448
      %v450 = vsub.f32 %v444, %v449
      %v451 = vmul.f32 %v450, 1.442695
      %v452 = vpow.pop %v451
      %v453 = vsel %vm370, %v452, 0.0
      %454 = vadd.xlane.f32.xlu0 %v453
      %v455 = vpop.xlane.xlu0 %454
      %v456 = vrcp.pop %v455
      %v457 = vmul.f32 %v452, %v456
      %458 = vst.msk [vmem:[%s211] sm:$0xff] %vm370, %v457
      %459 = vrot.lane.b32.xlu0 %v291, 120
      %v460 = vpop.permute.xlu0 %459
      %461 = vrot.lane.b32.xlu0 %v367, 120
      %v462 = vpop.permute.xlu0 %461
      %v463 = vsel %vm370, %v460, 0
      %v465 = vsel %vm370, %v462, 0
      %467 = vmatprep.subr.mxu0 0.0
      %468 = vmatpush1.xpose.msra.mxu0 0.0
      %469 = vmatprep.subr.mxu0 0.0
      %470 = vmatpush1.xpose.msra.mxu0 0.0
      %471 = vmatprep.subr.mxu0 0.0
      %472 = vmatpush1.xpose.msra.mxu0 0.0
      %473 = vmatprep.subr.mxu0 0.0
      %474 = vmatpush1.xpose.msra.mxu0 0.0
      %475 = vmatprep.subr.mxu0 0.0
      %476 = vmatpush1.xpose.msra.mxu0 0.0
      %477 = vmatprep.subr.mxu0 0.0
      %478 = vmatpush1.xpose.msra.mxu0 0.0
      %479 = vmatprep.subr.mxu0 0.0
      %480 = vmatpush1.xpose.msra.mxu0 0.0
      %481 = vmatprep.subr.mxu0 0.0
      %482 = vmatpush1.xpose.msra.mxu0 0.0
      %483 = vmatprep.subr.mxu0 0.0
      %484 = vmatpush1.xpose.msra.mxu0 0.0
      %485 = vmatprep.subr.mxu0 0.0
      %486 = vmatpush1.xpose.msra.mxu0 0.0
      %487 = vmatprep.subr.mxu0 0.0
      %488 = vmatpush1.xpose.msra.mxu0 0.0
      %489 = vmatprep.subr.mxu0 0.0
      %490 = vmatpush1.xpose.msra.mxu0 0.0
      %491 = vmatprep.subr.mxu0 0.0
      %492 = vmatpush1.xpose.msra.mxu0 0.0
      %493 = vmatprep.subr.mxu0 0.0
      %494 = vmatpush1.xpose.msra.mxu0 0.0
      %495 = vmatprep.subr.mxu0 0.0
      %496 = vmatpush1.xpose.msra.mxu0 0.0
      %497 = vmatprep.subr.mxu0 0.0
      %498 = vmatpush1.xpose.msra.mxu0 %v465
      %499 = vmatprep.subr.mxu0 0.0
      %500 = vmatpush2.xpose.msra.mxu0 0.0
      %501 = vmatprep.subr.mxu0 0.0
      %502 = vmatpush2.xpose.msra.mxu0 0.0
      %503 = vmatprep.subr.mxu0 0.0
      %504 = vmatpush2.xpose.msra.mxu0 0.0
      %505 = vmatprep.subr.mxu0 0.0
      %506 = vmatpush2.xpose.msra.mxu0 0.0
      %507 = vmatprep.subr.mxu0 0.0
      %508 = vmatpush2.xpose.msra.mxu0 0.0
      %509 = vmatprep.subr.mxu0 0.0
      %510 = vmatpush2.xpose.msra.mxu0 0.0
      %511 = vmatprep.subr.mxu0 0.0
      %512 = vmatpush2.xpose.msra.mxu0 0.0
      %513 = vmatprep.subr.mxu0 0.0
      %514 = vmatpush2.xpose.msra.mxu0 0.0
      %515 = vmatprep.subr.mxu0 0.0
      %516 = vmatpush2.xpose.msra.mxu0 0.0
      %517 = vmatprep.subr.mxu0 0.0
      %518 = vmatpush2.xpose.msra.mxu0 0.0
      %519 = vmatprep.subr.mxu0 0.0
      %520 = vmatpush2.xpose.msra.mxu0 0.0
      %521 = vmatprep.subr.mxu0 0.0
      %522 = vmatpush2.xpose.msra.mxu0 0.0
      %523 = vmatprep.subr.mxu0 0.0
      %524 = vmatpush2.xpose.msra.mxu0 0.0
      %525 = vmatprep.subr.mxu0 0.0
      %526 = vmatpush2.xpose.msra.mxu0 0.0
      %527 = vmatprep.subr.mxu0 0.0
      %528 = vmatpush2.xpose.msra.mxu0 0.0
      %529 = vmatprep.subr.mxu0 0.0
      %530 = vmatpush2.xpose.msra.mxu0 0.0
      %531 = vmatprep.mubr.f32.mxu0 0.0
      %532 = vmatmul.mubr.f32.gmra.mxu0 %v463
      %v533 = vpop.f32.mrf.mxu0
      %v534 = vadd.f32 0.0, %v533
      %v535 = vpop.f32.mrf.mxu0
      %536 = vdwg.mxu0
      %v537 = vsel %vm370, %v534, -inf
      %538 = vmax.xlane.f32.xlu0 %v537
      %v539 = vpop.xlane.xlu0 %538
      %v540 = vsub.f32 %v534, %v539
      %v541 = vmul.f32 %v540, 1.442695
      %v542 = vpow.pop %v541
      %v543 = vsel %vm370, %v542, 0.0
      %544 = vadd.xlane.f32.xlu0 %v543
      %v545 = vpop.xlane.xlu0 %544
      %v546 = vrcp.pop %v545
      %v547 = vmul.f32 %v542, %v546
      %s548 = scalar_lea.vmem %s211, 8
      %549 = vst.msk [vmem:[%s548] sm:$0xff] %vm370, %v547
      %550 = vrot.lane.b32.xlu0 %v291, 112
      %v551 = vpop.permute.xlu0 %550
      %552 = vrot.lane.b32.xlu0 %v367, 112
      %v553 = vpop.permute.xlu0 %552
      %v554 = vsel %vm370, %v551, 0
      %v556 = vsel %vm370, %v553, 0
      %558 = vmatprep.subr.mxu0 0.0
      %559 = vmatpush1.xpose.msra.mxu0 0.0
      %560 = vmatprep.subr.mxu0 0.0
      %561 = vmatpush1.xpose.msra.mxu0 0.0
      %562 = vmatprep.subr.mxu0 0.0
      %563 = vmatpush1.xpose.msra.mxu0 0.0
      %564 = vmatprep.subr.mxu0 0.0
      %565 = vmatpush1.xpose.msra.mxu0 0.0
      %566 = vmatprep.subr.mxu0 0.0
      %567 = vmatpush1.xpose.msra.mxu0 0.0
      %568 = vmatprep.subr.mxu0 0.0
      %569 = vmatpush1.xpose.msra.mxu0 0.0
      %570 = vmatprep.subr.mxu0 0.0
      %571 = vmatpush1.xpose.msra.mxu0 0.0
      %572 = vmatprep.subr.mxu0 0.0
      %573 = vmatpush1.xpose.msra.mxu0 0.0
      %574 = vmatprep.subr.mxu0 0.0
      %575 = vmatpush1.xpose.msra.mxu0 0.0
      %576 = vmatprep.subr.mxu0 0.0
      %577 = vmatpush1.xpose.msra.mxu0 0.0
      %578 = vmatprep.subr.mxu0 0.0
      %579 = vmatpush1.xpose.msra.mxu0 0.0
      %580 = vmatprep.subr.mxu0 0.0
      %581 = vmatpush1.xpose.msra.mxu0 0.0
      %582 = vmatprep.subr.mxu0 0.0
      %583 = vmatpush1.xpose.msra.mxu0 0.0
      %584 = vmatprep.subr.mxu0 0.0
      %585 = vmatpush1.xpose.msra.mxu0 0.0
      %586 = vmatprep.subr.mxu0 0.0
      %587 = vmatpush1.xpose.msra.mxu0 0.0
      %588 = vmatprep.subr.mxu0 0.0
      %589 = vmatpush1.xpose.msra.mxu0 %v556
      %590 = vmatprep.subr.mxu0 0.0
      %591 = vmatpush2.xpose.msra.mxu0 0.0
      %592 = vmatprep.subr.mxu0 0.0
      %593 = vmatpush2.xpose.msra.mxu0 0.0
      %594 = vmatprep.subr.mxu0 0.0
      %595 = vmatpush2.xpose.msra.mxu0 0.0
      %596 = vmatprep.subr.mxu0 0.0
      %597 = vmatpush2.xpose.msra.mxu0 0.0
      %598 = vmatprep.subr.mxu0 0.0
      %599 = vmatpush2.xpose.msra.mxu0 0.0
      %600 = vmatprep.subr.mxu0 0.0
      %601 = vmatpush2.xpose.msra.mxu0 0.0
      %602 = vmatprep.subr.mxu0 0.0
      %603 = vmatpush2.xpose.msra.mxu0 0.0
      %604 = vmatprep.subr.mxu0 0.0
      %605 = vmatpush2.xpose.msra.mxu0 0.0
      %606 = vmatprep.subr.mxu0 0.0
      %607 = vmatpush2.xpose.msra.mxu0 0.0
      %608 = vmatprep.subr.mxu0 0.0
      %609 = vmatpush2.xpose.msra.mxu0 0.0
      %610 = vmatprep.subr.mxu0 0.0
      %611 = vmatpush2.xpose.msra.mxu0 0.0
      %612 = vmatprep.subr.mxu0 0.0
      %613 = vmatpush2.xpose.msra.mxu0 0.0
      %614 = vmatprep.subr.mxu0 0.0
      %615 = vmatpush2.xpose.msra.mxu0 0.0
      %616 = vmatprep.subr.mxu0 0.0
      %617 = vmatpush2.xpose.msra.mxu0 0.0
      %618 = vmatprep.subr.mxu0 0.0
      %619 = vmatpush2.xpose.msra.mxu0 0.0
      %620 = vmatprep.subr.mxu0 0.0
      %621 = vmatpush2.xpose.msra.mxu0 0.0
      %622 = vmatprep.mubr.f32.mxu0 0.0
      %623 = vmatmul.mubr.f32.gmra.mxu0 %v554
      %v624 = vpop.f32.mrf.mxu0
      %v625 = vadd.f32 0.0, %v624
      %v626 = vpop.f32.mrf.mxu0
      %627 = vdwg.mxu0
      %v628 = vsel %vm370, %v625, -inf
      %629 = vmax.xlane.f32.xlu0 %v628
      %v630 = vpop.xlane.xlu0 %629
      %v631 = vsub.f32 %v625, %v630
      %v632 = vmul.f32 %v631, 1.442695
      %v633 = vpow.pop %v632
      %v634 = vsel %vm370, %v633, 0.0
      %635 = vadd.xlane.f32.xlu0 %v634
      %v636 = vpop.xlane.xlu0 %635
      %v637 = vrcp.pop %v636
      %v638 = vmul.f32 %v633, %v637
      %s639 = scalar_lea.vmem %s211, 16
      %640 = vst.msk [vmem:[%s639] sm:$0xff] %vm370, %v638
      %641 = vrot.lane.b32.xlu0 %v291, 104
      %v642 = vpop.permute.xlu0 %641
      %643 = vrot.lane.b32.xlu0 %v367, 104
      %v644 = vpop.permute.xlu0 %643
      %v645 = vsel %vm370, %v642, 0
      %v647 = vsel %vm370, %v644, 0
      %649 = vmatprep.subr.mxu0 0.0
      %650 = vmatpush1.xpose.msra.mxu0 0.0
      %651 = vmatprep.subr.mxu0 0.0
      %652 = vmatpush1.xpose.msra.mxu0 0.0
      %653 = vmatprep.subr.mxu0 0.0
      %654 = vmatpush1.xpose.msra.mxu0 0.0
      %655 = vmatprep.subr.mxu0 0.0
      %656 = vmatpush1.xpose.msra.mxu0 0.0
      %657 = vmatprep.subr.mxu0 0.0
      %658 = vmatpush1.xpose.msra.mxu0 0.0
      %659 = vmatprep.subr.mxu0 0.0
      %660 = vmatpush1.xpose.msra.mxu0 0.0
      %661 = vmatprep.subr.mxu0 0.0
      %662 = vmatpush1.xpose.msra.mxu0 0.0
      %663 = vmatprep.subr.mxu0 0.0
      %664 = vmatpush1.xpose.msra.mxu0 0.0
      %665 = vmatprep.subr.mxu0 0.0
      %666 = vmatpush1.xpose.msra.mxu0 0.0
      %667 = vmatprep.subr.mxu0 0.0
      %668 = vmatpush1.xpose.msra.mxu0 0.0
      %669 = vmatprep.subr.mxu0 0.0
      %670 = vmatpush1.xpose.msra.mxu0 0.0
      %671 = vmatprep.subr.mxu0 0.0
      %672 = vmatpush1.xpose.msra.mxu0 0.0
      %673 = vmatprep.subr.mxu0 0.0
      %674 = vmatpush1.xpose.msra.mxu0 0.0
      %675 = vmatprep.subr.mxu0 0.0
      %676 = vmatpush1.xpose.msra.mxu0 0.0
      %677 = vmatprep.subr.mxu0 0.0
      %678 = vmatpush1.xpose.msra.mxu0 0.0
      %679 = vmatprep.subr.mxu0 0.0
      %680 = vmatpush1.xpose.msra.mxu0 %v647
      %681 = vmatprep.subr.mxu0 0.0
      %682 = vmatpush2.xpose.msra.mxu0 0.0
      %683 = vmatprep.subr.mxu0 0.0
      %684 = vmatpush2.xpose.msra.mxu0 0.0
      %685 = vmatprep.subr.mxu0 0.0
      %686 = vmatpush2.xpose.msra.mxu0 0.0
      %687 = vmatprep.subr.mxu0 0.0
      %688 = vmatpush2.xpose.msra.mxu0 0.0
      %689 = vmatprep.subr.mxu0 0.0
      %690 = vmatpush2.xpose.msra.mxu0 0.0
      %691 = vmatprep.subr.mxu0 0.0
      %692 = vmatpush2.xpose.msra.mxu0 0.0
      %693 = vmatprep.subr.mxu0 0.0
      %694 = vmatpush2.xpose.msra.mxu0 0.0
      %695 = vmatprep.subr.mxu0 0.0
      %696 = vmatpush2.xpose.msra.mxu0 0.0
      %697 = vmatprep.subr.mxu0 0.0
      %698 = vmatpush2.xpose.msra.mxu0 0.0
      %699 = vmatprep.subr.mxu0 0.0
      %700 = vmatpush2.xpose.msra.mxu0 0.0
      %701 = vmatprep.subr.mxu0 0.0
      %702 = vmatpush2.xpose.msra.mxu0 0.0
      %703 = vmatprep.subr.mxu0 0.0
      %704 = vmatpush2.xpose.msra.mxu0 0.0
      %705 = vmatprep.subr.mxu0 0.0
      %706 = vmatpush2.xpose.msra.mxu0 0.0
      %707 = vmatprep.subr.mxu0 0.0
      %708 = vmatpush2.xpose.msra.mxu0 0.0
      %709 = vmatprep.subr.mxu0 0.0
      %710 = vmatpush2.xpose.msra.mxu0 0.0
      %711 = vmatprep.subr.mxu0 0.0
      %712 = vmatpush2.xpose.msra.mxu0 0.0
      %713 = vmatprep.mubr.f32.mxu0 0.0
      %714 = vmatmul.mubr.f32.gmra.mxu0 %v645
      %v715 = vpop.f32.mrf.mxu0
      %v716 = vadd.f32 0.0, %v715
      %v717 = vpop.f32.mrf.mxu0
      %718 = vdwg.mxu0
      %v719 = vsel %vm370, %v716, -inf
      %720 = vmax.xlane.f32.xlu0 %v719
      %v721 = vpop.xlane.xlu0 %720
      %v722 = vsub.f32 %v716, %v721
      %v723 = vmul.f32 %v722, 1.442695
      %v724 = vpow.pop %v723
      %v725 = vsel %vm370, %v724, 0.0
      %726 = vadd.xlane.f32.xlu0 %v725
      %v727 = vpop.xlane.xlu0 %726
      %v728 = vrcp.pop %v727
      %v729 = vmul.f32 %v724, %v728
      %s730 = scalar_lea.vmem %s211, 24
      %731 = vst.msk [vmem:[%s730] sm:$0xff] %vm370, %v729
      %p732 = scmp.lt.s32.totalorder %s15, 1
      %s733 = scalar_select %p732, %s15, 1
      %s734 = smul.addr %s733, 4
      %s735 = smul.addr %s734, 8
      %s736 = scalar_lea.vmem %s4, %s735
      // Predicated region
      $region37: #{channel_video_attention.2} parent=35 // pred_check
        %p737 = pneg %p127
      $region38: #{channel_video_attention.2} parent=35 // pred_check_branch
        %739 = sbr.rel (%p737) target = $region40
      $region39: #{channel_video_attention.2} parent=35 // pred_region
        _
      $region40: #{channel_video_attention.2} parent=35 // pred_fallthru
        _
    $region36: #{channel_video_attention.2} parent=5 // pred_fallthru
      _
    %p740 = scmp.le.s32.totalorder 2, %s10
    // Predicated region
    $region41: #{channel_video_attention.2} parent=5 // pred_check
      %p741 = pneg %p740
    $region42: #{channel_video_attention.2} parent=5 // pred_check_branch
      %743 = sbr.rel (%p741) target = $region44
    $region43: #{channel_video_attention.2} parent=5 // pred_region
      %s744 = ssub.s32 %s10, 2
      // Predicated region
      $region45: #{channel_video_attention.2} parent=43 // pred_check
        %p745 = pneg %p133
      $region46: #{channel_video_attention.2} parent=43 // pred_check_branch
        %747 = sbr.rel (%p745) target = $region48
      $region47: #{channel_video_attention.2} parent=43 // pred_region
        %p748 = scmp.lt.s32.totalorder %s16, 1
        %s749 = scalar_select %p748, %s16, 1
        %s750 = smul.addr %s749, 4
        %s751 = smul.addr %s750, 8
        %s752 = scalar_lea.vmem %s4, %s751
      $region48: #{channel_video_attention.2} parent=43 // pred_fallthru
        _
    $region44: #{channel_video_attention.2} parent=5 // pred_fallthru
      _
  $region6: #{channel_video_attention.2} parent=0 // loop_footer
    %s14 = sadd.s32 1, %s10
  $region7: #{channel_video_attention.2} parent=0 // loop_footer_branch
    %9 = sbr.rel target = $region3
  $region8: #{channel_video_attention.2} parent=0 // loop_exit
    _

// kernel: channel_video_attention.3
$region0: #{channel_video_attention.3}
  #allocation0 [shape = 'u32[]', space=smem, size = 0x4, offset = 0x4, fixed_abs, tag = 'smem constant byte address 0x4 - core index']
  #allocation1 [shape = 'u32[144,128]{1,0:T(1,128)}', space=vmem, size = 0x12000, scoped, tag = 'internal scratch']
  %s0 = inlined_call_operand.vmem [shape: f32[2,256,256], index: 0, kind: input, shape index: {}]
  %s1 = inlined_call_operand.vmem [shape: f32[2,256,256], index: 1, kind: input, shape index: {}]
  %s2 = inlined_call_operand.vmem [shape: f32[2,256,256], index: 2, kind: output, shape index: {}]
  %s3 = sld [smem:[#allocation0]]
  $region41: #{channel_video_attention.3} parent=0
    _
  %s5 = ssub.s32 1, %s3
  %s6 = scalar_select 0, %s5, %s3
  loop: start=0, step=1, limit=4
  $region2: #{channel_video_attention.3} parent=0 // loop_pre_header
    _
  $region3: #{channel_video_attention.3} parent=0 // loop_header
    %s8 = sphi 0, %s12
    %p9 = scmp.ge.s32.totalorder %s8, 4
    %s15 = sphi 0, %s27
    %s16 = sphi 0, %s23
    %s17 = sphi 0, %s15
    %s18 = sphi 0, %s16
    %s19 = sphi 0, %s17
    %s20 = sphi 0, %s18
    %s30 = sphi 0, %s32
    %s33 = sphi 0, %s30
    %s34 = sphi 0, %s33
    %s50 = sphi 0, %s34
    %s58 = sphi 0, %s60
    %s61 = sphi 0, %s58
    %s62 = sphi 0, %s61
    %s78 = sphi 0, %s62
    %s86 = sphi 0, %s88
    %s89 = sphi 0, %s86
    %s90 = sphi 0, %s89
    %s106 = sphi 0, %s90
  $region4: #{channel_video_attention.3} parent=0 // loop_header_branch
    %11 = sbr.rel (%p9) target = $region8
  $region5: #{channel_video_attention.3} parent=0 // loop_body
    %s13 = ssub.s32 %s8, 1
    %s14 = ssub.s32 %s8, 2
    %s21 = sadd.s32 1, %s16
    %p22 = scmp.ge.s32.totalorder %s21, 1
    %s23 = scalar_select %p22, 0, %s21
    %s24 = sadd.s32 1, %s15
    %s25 = scalar_select %p22, %s24, %s15
    %p26 = scmp.ge.s32.totalorder %s25, 2
    %s27 = scalar_select %p26, 0, %s25
    %s28 = ssub.s32 %s15, %s27
    %p29 = scmp.eq.s32.totalorder %s28, 0
    %s31 = sadd.s32 %s30, 1
    %s32 = scalar_select %p29, %s30, %s31
    %p35 = pneg %p29
    %p36 = scmp.eq.s32.totalorder %s8, 1
    %p37 = por %p35, %p36
    %p38 = scmp.ne.s32.totalorder %s30, %s33
    %p39 = scmp.eq.s32.totalorder %s8, 0
    %p40 = por %p38, %p39
    %p41 = scmp.ne.s32.totalorder %s30, %s33
    %p42 = scmp.eq.s32.totalorder %s13, 1
    %p43 = por %p41, %p42
    %p44 = scmp.ne.s32.totalorder %s33, %s34
    %p45 = scmp.eq.s32.totalorder %s13, 0
    %p46 = por %p44, %p45
    %p47 = scmp.ne.s32.totalorder %s33, %s34
    %p48 = scmp.eq.s32.totalorder %s14, 1
    %p49 = por %p47, %p48
    %p51 = scmp.ne.s32.totalorder %s34, %s50
    %p52 = scmp.eq.s32.totalorder %s14, 0
    %p53 = por %p51, %p52
    %s54 = ssub.s32 %s15, %s27
    %s55 = ssub.s32 %s16, %s23
    %s56 = sor.u32 %s54, %s55
    %p57 = scmp.eq.s32.totalorder %s56, 0
    %s59 = sadd.s32 %s58, 1
    %s60 = scalar_select %p57, %s58, %s59
    %p63 = pneg %p57
    %p64 = scmp.eq.s32.totalorder %s8, 1
    %p65 = por %p63, %p64
    %p66 = scmp.ne.s32.totalorder %s58, %s61
    %p67 = scmp.eq.s32.totalorder %s8, 0
    %p68 = por %p66, %p67
    %p69 = scmp.ne.s32.totalorder %s58, %s61
    %p70 = scmp.eq.s32.totalorder %s13, 1
    %p71 = por %p69, %p70
    %p72 = scmp.ne.s32.totalorder %s61, %s62
    %p73 = scmp.eq.s32.totalorder %s13, 0
    %p74 = por %p72, %p73
    %p75 = scmp.ne.s32.totalorder %s61, %s62
    %p76 = scmp.eq.s32.totalorder %s14, 1
    %p77 = por %p75, %p76
    %p79 = scmp.ne.s32.totalorder %s62, %s78
    %p80 = scmp.eq.s32.totalorder %s14, 0
    %p81 = por %p79, %p80
    %s82 = ssub.s32 %s15, %s27
    %s83 = ssub.s32 %s16, %s23
    %s84 = sor.u32 %s82, %s83
    %p85 = scmp.eq.s32.totalorder %s84, 0
    %s87 = sadd.s32 %s86, 1
    %s88 = scalar_select %p85, %s86, %s87
    %p91 = pneg %p85
    %p92 = scmp.eq.s32.totalorder %s8, 1
    %p93 = por %p91, %p92
    %p94 = scmp.ne.s32.totalorder %s86, %s89
    %p95 = scmp.eq.s32.totalorder %s8, 0
    %p96 = por %p94, %p95
    %p97 = scmp.ne.s32.totalorder %s86, %s89
    %p98 = scmp.eq.s32.totalorder %s13, 1
    %p99 = por %p97, %p98
    %p100 = scmp.ne.s32.totalorder %s89, %s90
    %p101 = scmp.eq.s32.totalorder %s13, 0
    %p102 = por %p100, %p101
    %p103 = scmp.ne.s32.totalorder %s89, %s90
    %p104 = scmp.eq.s32.totalorder %s14, 1
    %p105 = por %p103, %p104
    %p107 = scmp.ne.s32.totalorder %s90, %s106
    %p108 = scmp.eq.s32.totalorder %s14, 0
    %p109 = por %p107, %p108
    %p110 = scmp.le.s32.totalorder 1, %s8
    %p111 = scmp.lt.s32.totalorder %s8, 3
    %p112 = pnand %p110, %p111
    %p113 = pneg %p112
    // Predicated region
    $region9: #{channel_video_attention.3} parent=5 // pred_check
      _
    $region10: #{channel_video_attention.3} parent=5 // pred_check_branch
      %115 = sbr.rel (%p112) target = $region12
    $region11: #{channel_video_attention.3} parent=5 // pred_region
      %s116 = ssub.s32 %s8, 1
    $region12: #{channel_video_attention.3} parent=5 // pred_fallthru
      _
    %p117 = scmp.lt.s32.totalorder %s8, 2
    // Predicated region
    $region13: #{channel_video_attention.3} parent=5 // pred_check
      %p118 = pneg %p117
    $region14: #{channel_video_attention.3} parent=5 // pred_check_branch
      %120 = sbr.rel (%p118) target = $region16
    $region15: #{channel_video_attention.3} parent=5 // pred_region
      // Predicated region
      $region17: #{channel_video_attention.3} parent=15 // pred_check
        %p121 = pneg %p40
      $region18: #{channel_video_attention.3} parent=15 // pred_check_branch
        %123 = sbr.rel (%p121) target = $region20
      $region19: #{channel_video_attention.3} parent=15 // pred_region
        %p124 = scmp.lt.s32.totalorder %s15, 1
        %s125 = scalar_select %p124, %s15, 1
        %s126 = smul.addr %s125, 64
        %s127 = smul.addr %s126, 8
        %s128 = scalar_lea.vmem %s0, %s127
      $region20: #{channel_video_attention.3} parent=15 // pred_fallthru
        _
      // Predicated region
      $region21: #{channel_video_attention.3} parent=15 // pred_check
        %p129 = pneg %p68
      $region22: #{channel_video_attention.3} parent=15 // pred_check_branch
        %131 = sbr.rel (%p129) target = $region24
      $region23: #{channel_video_attention.3} parent=15 // pred_region
        %s132 = smul.u32 2, %s16
        %p133 = scmp.lt.s32.totalorder %s15, 1
        %s134 = scalar_select %p133, %s15, 1
        %p135 = scmp.lt.s32.totalorder %s132, 1
        %s136 = scalar_select %p135, %s132, 1
        %s137 = smul.addr %s134, 64
        %s138 = sadd.s32 %s136, %s137
        %s139 = smul.addr %s138, 8
        %s140 = scalar_lea.vmem %s1, %s139
        %s141 = smul.u32 2, %s16
      $region24: #{channel_video_attention.3} parent=15 // pred_fallthru
        _
    $region16: #{channel_video_attention.3} parent=5 // pred_fallthru
      _
    %p142 = scmp.le.s32.totalorder 1, %s8
    %p143 = scmp.lt.s32.totalorder %s8, 3
    %p144 = pnand %p142, %p143
    %p145 = pneg %p144
    // Predicated region
    $region25: #{channel_video_attention.3} parent=5 // pred_check
      _
    $region26: #{channel_video_attention.3} parent=5 // pred_check_branch
      %147 = sbr.rel (%p144) target = $region28
    $region27: #{channel_video_attention.3} parent=5 // pred_region
      %s148 = ssub.s32 %s8, 1
      %p149 = scmp.lt.s32.totalorder %s17, 1
      %s150 = scalar_select %p149, %s17, 1
      %s151 = smul.addr %s150, 64
      %s152 = smul.addr %s151, 8
      %s153 = scalar_lea.vmem %s0, %s152
      %p154 = pneg %p46
      %p155 = pneg %p43
      %s156 = smul.u32 2, %s18
      %p157 = scmp.lt.s32.totalorder %s17, 1
      %s158 = scalar_select %p157, %s17, 1
      %p159 = scmp.lt.s32.totalorder %s156, 1
      %s160 = scalar_select %p159, %s156, 1
      %s161 = smul.addr %s158, 64
      %s162 = sadd.s32 %s160, %s161
      %s163 = smul.addr %s162, 8
      %s164 = scalar_lea.vmem %s1, %s163
      %p165 = pneg %p74
      %p166 = pneg %p71
      %p167 = pneg %p102
      %p168 = pneg %p99
      %s169 = smul.u32 2, %s18
      %p170 = scmp.lt.s32.totalorder %s17, 1
      %s171 = scalar_select %p170, %s17, 1
      %p172 = scmp.lt.s32.totalorder %s169, 1
      %s173 = scalar_select %p172, %s169, 1
      %s174 = smul.addr %s171, 64
      %s175 = sadd.s32 %s173, %s174
      %s176 = smul.addr %s175, 8
      %s177 = scalar_lea.vmem %s2, %s176
      %p178 = scmp.lt.s32.totalorder %s17, 1
      %s179 = scalar_select %p178, %s17, 1
      %s180 = smul.addr %s179, 64
      %s181 = smul.addr %s180, 8
      %s182 = scalar_lea.vmem %s0, %s181
      %s183 = smul.u32 2, %s18
      %p184 = scmp.lt.s32.totalorder %s17, 1
      %s185 = scalar_select %p184, %s17, 1
      %p186 = scmp.lt.s32.totalorder %s183, 1
      %s187 = scalar_select %p186, %s183, 1
      %s188 = smul.addr %s185, 64
      %s189 = sadd.s32 %s187, %s188
      %s190 = smul.addr %s189, 8
      %s191 = scalar_lea.vmem %s1, %s190
      %s192 = smul.u32 2, %s18
      %s193 = smul.u32 2, %s18
      %p194 = scmp.lt.s32.totalorder %s17, 1
      %s195 = scalar_select %p194, %s17, 1
      %p196 = scmp.lt.s32.totalorder %s193, 1
      %s197 = scalar_select %p196, %s193, 1
      %s198 = smul.addr %s195, 64
      %s199 = sadd.s32 %s197, %s198
      %s200 = smul.addr %s199, 8
      %s201 = scalar_lea.vmem %s2, %s200
      %s202 = smul.u32 2, %s18
      %v203 = vld [vmem:[%s182] sm:$0xff]
      %v204 = vld [vmem:[%s182 + $0x8] sm:$0xff]
      %v205 = vld [vmem:[%s182 + $0x10] sm:$0xff]
      %v206 = vld [vmem:[%s182 + $0x18] sm:$0xff]
      %v207 = vld [vmem:[%s182 + $0x20] sm:$0xff]
      %v208 = vld [vmem:[%s182 + $0x28] sm:$0xff]
      %v209 = vld [vmem:[%s182 + $0x30] sm:$0xff]
      %v210 = vld [vmem:[%s182 + $0x38] sm:$0xff]
      %v211 = vld [vmem:[%s182 + $0x40] sm:$0xff]
      %v212 = vld [vmem:[%s182 + $0x48] sm:$0xff]
      %v213 = vld [vmem:[%s182 + $0x50] sm:$0xff]
      %v214 = vld [vmem:[%s182 + $0x58] sm:$0xff]
      %v215 = vld [vmem:[%s182 + $0x60] sm:$0xff]
      %v216 = vld [vmem:[%s182 + $0x68] sm:$0xff]
      %v217 = vld [vmem:[%s182 + $0x70] sm:$0xff]
      %v218 = vld [vmem:[%s182 + $0x78] sm:$0xff]
      %v219 = vld [vmem:[%s182 + $0x80] sm:$0xff]
      %v220 = vld [vmem:[%s182 + $0x88] sm:$0xff]
      %v221 = vld [vmem:[%s182 + $0x90] sm:$0xff]
      %v222 = vld [vmem:[%s182 + $0x98] sm:$0xff]
      %v223 = vld [vmem:[%s182 + $0xa0] sm:$0xff]
      %v224 = vld [vmem:[%s182 + $0xa8] sm:$0xff]
      %v225 = vld [vmem:[%s182 + $0xb0] sm:$0xff]
      %v226 = vld [vmem:[%s182 + $0xb8] sm:$0xff]
      %v227 = vld [vmem:[%s182 + $0xc0] sm:$0xff]
      %v228 = vld [vmem:[%s182 + $0xc8] sm:$0xff]
      %v229 = vld [vmem:[%s182 + $0xd0] sm:$0xff]
      %v230 = vld [vmem:[%s182 + $0xd8] sm:$0xff]
      %v231 = vld [vmem:[%s182 + $0xe0] sm:$0xff]
      %v232 = vld [vmem:[%s182 + $0xe8] sm:$0xff]
      %v233 = vld [vmem:[%s182 + $0xf0] sm:$0xff]
      %v234 = vld [vmem:[%s182 + $0xf8] sm:$0xff]
      %v235 = vld [vmem:[%s182 + $0x100] sm:$0xff]
      %v236 = vld [vmem:[%s182 + $0x108] sm:$0xff]
      %v237 = vld [vmem:[%s182 + $0x110] sm:$0xff]
      %v238 = vld [vmem:[%s182 + $0x118] sm:$0xff]
      %v239 = vld [vmem:[%s182 + $0x120] sm:$0xff]
      %v240 = vld [vmem:[%s182 + $0x128] sm:$0xff]
      %v241 = vld [vmem:[%s182 + $0x130] sm:$0xff]
      %v242 = vld [vmem:[%s182 + $0x138] sm:$0xff]
      %v243 = vld [vmem:[%s182 + $0x140] sm:$0xff]
      %v244 = vld [vmem:[%s182 + $0x148] sm:$0xff]
      %v245 = vld [vmem:[%s182 + $0x150] sm:$0xff]
      %v246 = vld [vmem:[%s182 + $0x158] sm:$0xff]
      %v247 = vld [vmem:[%s182 + $0x160] sm:$0xff]
      %v248 = vld [vmem:[%s182 + $0x168] sm:$0xff]
      %v249 = vld [vmem:[%s182 + $0x170] sm:$0xff]
      %v250 = vld [vmem:[%s182 + $0x178] sm:$0xff]
      %v251 = vld [vmem:[%s182 + $0x180] sm:$0xff]
      %v252 = vld [vmem:[%s182 + $0x188] sm:$0xff]
      %v253 = vld [vmem:[%s182 + $0x190] sm:$0xff]
      %v254 = vld [vmem:[%s182 + $0x198] sm:$0xff]
      %v255 = vld [vmem:[%s182 + $0x1a0] sm:$0xff]
      %v256 = vld [vmem:[%s182 + $0x1a8] sm:$0xff]
      %v257 = vld [vmem:[%s182 + $0x1b0] sm:$0xff]
      %v258 = vld [vmem:[%s182 + $0x1b8] sm:$0xff]
      %v259 = vld [vmem:[%s182 + $0x1c0] sm:$0xff]
      %v260 = vld [vmem:[%s182 + $0x1c8] sm:$0xff]
      %v261 = vld [vmem:[%s182 + $0x1d0] sm:$0xff]
      %v262 = vld [vmem:[%s182 + $0x1d8] sm:$0xff]
      %v263 = vld [vmem:[%s182 + $0x1e0] sm:$0xff]
      %v264 = vld [vmem:[%s182 + $0x1e8] sm:$0xff]
      %v265 = vld [vmem:[%s182 + $0x1f0] sm:$0xff]
      %v266 = vld [vmem:[%s182 + $0x1f8] sm:$0xff]
      %v267 = vld [vmem:[%s191] sm:$0xff]
      %v268 = vld [vmem:[%s191 + $0x8] sm:$0xff]
      %v269 = vld [vmem:[%s191 + $0x10] sm:$0xff]
      %v270 = vld [vmem:[%s191 + $0x18] sm:$0xff]
      %v271 = vld [vmem:[%s191 + $0x20] sm:$0xff]
      %v272 = vld [vmem:[%s191 + $0x28] sm:$0xff]
      %v273 = vld [vmem:[%s191 + $0x30] sm:$0xff]
      %v274 = vld [vmem:[%s191 + $0x38] sm:$0xff]
      %v275 = vld [vmem:[%s191 + $0x40] sm:$0xff]
      %v276 = vld [vmem:[%s191 + $0x48] sm:$0xff]
      %v277 = vld [vmem:[%s191 + $0x50] sm:$0xff]
      %v278 = vld [vmem:[%s191 + $0x58] sm:$0xff]
      %v279 = vld [vmem:[%s191 + $0x60] sm:$0xff]
      %v280 = vld [vmem:[%s191 + $0x68] sm:$0xff]
      %v281 = vld [vmem:[%s191 + $0x70] sm:$0xff]
      %v282 = vld [vmem:[%s191 + $0x78] sm:$0xff]
      %v283 = vld [vmem:[%s191 + $0x80] sm:$0xff]
      %v284 = vld [vmem:[%s191 + $0x88] sm:$0xff]
      %v285 = vld [vmem:[%s191 + $0x90] sm:$0xff]
      %v286 = vld [vmem:[%s191 + $0x98] sm:$0xff]
      %v287 = vld [vmem:[%s191 + $0xa0] sm:$0xff]
      %v288 = vld [vmem:[%s191 + $0xa8] sm:$0xff]
      %v289 = vld [vmem:[%s191 + $0xb0] sm:$0xff]
      %v290 = vld [vmem:[%s191 + $0xb8] sm:$0xff]
      %v291 = vld [vmem:[%s191 + $0xc0] sm:$0xff]
      %v292 = vld [vmem:[%s191 + $0xc8] sm:$0xff]
      %v293 = vld [vmem:[%s191 + $0xd0] sm:$0xff]
      %v294 = vld [vmem:[%s191 + $0xd8] sm:$0xff]
      %v295 = vld [vmem:[%s191 + $0xe0] sm:$0xff]
      %v296 = vld [vmem:[%s191 + $0xe8] sm:$0xff]
      %v297 = vld [vmem:[%s191 + $0xf0] sm:$0xff]
      %v298 = vld [vmem:[%s191 + $0xf8] sm:$0xff]
      %v299 = vld [vmem:[%s191 + $0x100] sm:$0xff]
      %v300 = vld [vmem:[%s191 + $0x108] sm:$0xff]
      %v301 = vld [vmem:[%s191 + $0x110] sm:$0xff]
      %v302 = vld [vmem:[%s191 + $0x118] sm:$0xff]
      %v303 = vld [vmem:[%s191 + $0x120] sm:$0xff]
      %v304 = vld [vmem:[%s191 + $0x128] sm:$0xff]
      %v305 = vld [vmem:[%s191 + $0x130] sm:$0xff]
      %v306 = vld [vmem:[%s191 + $0x138] sm:$0xff]
      %v307 = vld [vmem:[%s191 + $0x140] sm:$0xff]
      %v308 = vld [vmem:[%s191 + $0x148] sm:$0xff]
      %v309 = vld [vmem:[%s191 + $0x150] sm:$0xff]
      %v310 = vld [vmem:[%s191 + $0x158] sm:$0xff]
      %v311 = vld [vmem:[%s191 + $0x160] sm:$0xff]
      %v312 = vld [vmem:[%s191 + $0x168] sm:$0xff]
      %v313 = vld [vmem:[%s191 + $0x170] sm:$0xff]
      %v314 = vld [vmem:[%s191 + $0x178] sm:$0xff]
      %v315 = vld [vmem:[%s191 + $0x180] sm:$0xff]
      %v316 = vld [vmem:[%s191 + $0x188] sm:$0xff]
      %v317 = vld [vmem:[%s191 + $0x190] sm:$0xff]
      %v318 = vld [vmem:[%s191 + $0x198] sm:$0xff]
      %v319 = vld [vmem:[%s191 + $0x1a0] sm:$0xff]
      %v320 = vld [vmem:[%s191 + $0x1a8] sm:$0xff]
      %v321 = vld [vmem:[%s191 + $0x1b0] sm:$0xff]
      %v322 = vld [vmem:[%s191 + $0x1b8] sm:$0xff]
      %v323 = vld [vmem:[%s191 + $0x1c0] sm:$0xff]
      %v324 = vld [vmem:[%s191 + $0x1c8] sm:$0xff]
      %v325 = vld [vmem:[%s191 + $0x1d0] sm:$0xff]
      %v326 = vld [vmem:[%s191 + $0x1d8] sm:$0xff]
      %v327 = vld [vmem:[%s191 + $0x1e0] sm:$0xff]
      %v328 = vld [vmem:[%s191 + $0x1e8] sm:$0xff]
      %v329 = vld [vmem:[%s191 + $0x1f0] sm:$0xff]
      %v330 = vld [vmem:[%s191 + $0x1f8] sm:$0xff]
      %331 = vmatprep.subr.mxu0 %v298
      %332 = vmatpush1.msra.mxu0 %v297
      %333 = vmatprep.subr.mxu0 %v296
      %334 = vmatpush1.msra.mxu0 %v295
      %335 = vmatprep.subr.mxu0 %v294
      %336 = vmatpush1.msra.mxu0 %v293
      %337 = vmatprep.subr.mxu0 %v292
      %338 = vmatpush1.msra.mxu0 %v291
      %339 = vmatprep.subr.mxu0 %v290
      %340 = vmatpush1.msra.mxu0 %v289
      %341 = vmatprep.subr.mxu0 %v288
      %342 = vmatpush1.msra.mxu0 %v287
      %343 = vmatprep.subr.mxu0 %v286
      %344 = vmatpush1.msra.mxu0 %v285
      %345 = vmatprep.subr.mxu0 %v284
      %346 = vmatpush1.msra.mxu0 %v283
      %347 = vmatprep.subr.mxu0 %v282
      %348 = vmatpush1.msra.mxu0 %v281
      %349 = vmatprep.subr.mxu0 %v280
      %350 = vmatpush1.msra.mxu0 %v279
      %351 = vmatprep.subr.mxu0 %v278
      %352 = vmatpush1.msra.mxu0 %v277
      %353 = vmatprep.subr.mxu0 %v276
      %354 = vmatpush1.msra.mxu0 %v275
      %355 = vmatprep.subr.mxu0 %v274
      %356 = vmatpush1.msra.mxu0 %v273
      %357 = vmatprep.subr.mxu0 %v272
      %358 = vmatpush1.msra.mxu0 %v271
      %359 = vmatprep.subr.mxu0 %v270
      %360 = vmatpush1.msra.mxu0 %v269
      %361 = vmatprep.subr.mxu0 %v268
      %362 = vmatpush1.msra.mxu0 %v267
      %363 = vmatprep.subr.mxu0 %v330
      %364 = vmatpush2.msra.mxu0 %v329
      %365 = vmatprep.subr.mxu0 %v328
      %366 = vmatpush2.msra.mxu0 %v327
      %367 = vmatprep.subr.mxu0 %v326
      %368 = vmatpush2.msra.mxu0 %v325
      %369 = vmatprep.subr.mxu0 %v324
      %370 = vmatpush2.msra.mxu0 %v323
      %371 = vmatprep.subr.mxu0 %v322
      %372 = vmatpush2.msra.mxu0 %v321
      %373 = vmatprep.subr.mxu0 %v320
      %374 = vmatpush2.msra.mxu0 %v319
      %375 = vmatprep.subr.mxu0 %v318
      %376 = vmatpush2.msra.mxu0 %v317
      %377 = vmatprep.subr.mxu0 %v316
      %378 = vmatpush2.msra.mxu0 %v315
      %379 = vmatprep.subr.mxu0 %v314
      %380 = vmatpush2.msra.mxu0 %v313
      %381 = vmatprep.subr.mxu0 %v312
      %382 = vmatpush2.msra.mxu0 %v311
      %383 = vmatprep.subr.mxu0 %v310
      %384 = vmatpush2.msra.mxu0 %v309
      %385 = vmatprep.subr.mxu0 %v308
      %386 = vmatpush2.msra.mxu0 %v307
      %387 = vmatprep.subr.mxu0 %v306
      %388 = vmatpush2.msra.mxu0 %v305
      %389 = vmatprep.subr.mxu0 %v304
      %390 = vmatpush2.msra.mxu0 %v303
      %391 = vmatprep.subr.mxu0 %v302
      %392 = vmatpush2.msra.mxu0 %v301
      %393 = vmatprep.subr.mxu0 %v300
      %394 = vmatpush2.msra.mxu0 %v299
      %395 = vmatprep.mubr.f32.mxu0 %v204
      %396 = vmatmul.mubr.f32.gmra.mxu0 %v203
      %v397 = vpop.f32.mrf.mxu0
      %v398 = vadd.f32 0.0, %v397
      %v399 = vpop.f32.mrf.mxu0
      %v400 = vadd.f32 0.0, %v399
      %401 = vmatprep.mubr.f32.mxu0 %v206
      %402 = vmatmul.mubr.f32.gmra.mxu0 %v205
      %v403 = vpop.f32.mrf.mxu0
      %v404 = vadd.f32 0.0, %v403
      %v405 = vpop.f32.mrf.mxu0
      %v406 = vadd.f32 0.0, %v405
      %407 = vmatprep.mubr.f32.mxu0 %v208
      %408 = vmatmul.mubr.f32.gmra.mxu0 %v207
      %v409 = vpop.f32.mrf.mxu0
      %v410 = vadd.f32 0.0, %v409
      %v411 = vpop.f32.mrf.mxu0
      %v412 = vadd.f32 0.0, %v411
      %413 = vmatprep.mubr.f32.mxu0 %v210
      %414 = vmatmul.mubr.f32.gmra.mxu0 %v209
      %v415 = vpop.f32.mrf.mxu0
      %v416 = vadd.f32 0.0, %v415
      %v417 = vpop.f32.mrf.mxu0
      %v418 = vadd.f32 0.0, %v417
      %419 = vmatprep.mubr.f32.mxu0 %v212
      %420 = vmatmul.mubr.f32.gmra.mxu0 %v211
      %v421 = vpop.f32.mrf.mxu0
      %v422 = vadd.f32 0.0, %v421
      %v423 = vpop.f32.mrf.mxu0
      %v424 = vadd.f32 0.0, %v423
      %425 = vmatprep.mubr.f32.mxu0 %v214
      %426 = vmatmul.mubr.f32.gmra.mxu0 %v213
      %v427 = vpop.f32.mrf.mxu0
      %v428 = vadd.f32 0.0, %v427
      %v429 = vpop.f32.mrf.mxu0
      %v430 = vadd.f32 0.0, %v429
      %431 = vmatprep.mubr.f32.mxu0 %v216
      %432 = vmatmul.mubr.f32.gmra.mxu0 %v215
      %v433 = vpop.f32.mrf.mxu0
      %v434 = vadd.f32 0.0, %v433
      %v435 = vpop.f32.mrf.mxu0
      %v436 = vadd.f32 0.0, %v435
      %437 = vmatprep.mubr.f32.mxu0 %v218
      %438 = vmatmul.mubr.f32.gmra.mxu0 %v217
      %v439 = vpop.f32.mrf.mxu0
      %v440 = vadd.f32 0.0, %v439
      %v441 = vpop.f32.mrf.mxu0
      %v442 = vadd.f32 0.0, %v441
      %443 = vmatprep.mubr.f32.mxu0 %v220
      %444 = vmatmul.mubr.f32.gmra.mxu0 %v219
      %v445 = vpop.f32.mrf.mxu0
      %v446 = vadd.f32 0.0, %v445
      %v447 = vpop.f32.mrf.mxu0
      %v448 = vadd.f32 0.0, %v447
      %449 = vmatprep.mubr.f32.mxu0 %v222
      %450 = vmatmul.mubr.f32.gmra.mxu0 %v221
      %v451 = vpop.f32.mrf.mxu0
      %v452 = vadd.f32 0.0, %v451
      %v453 = vpop.f32.mrf.mxu0
      %v454 = vadd.f32 0.0, %v453
      %455 = vmatprep.mubr.f32.mxu0 %v224
      %456 = vmatmul.mubr.f32.gmra.mxu0 %v223
      %v457 = vpop.f32.mrf.mxu0
      %v458 = vadd.f32 0.0, %v457
      %v459 = vpop.f32.mrf.mxu0
      %v460 = vadd.f32 0.0, %v459
      %461 = vmatprep.mubr.f32.mxu0 %v226
      %462 = vmatmul.mubr.f32.gmra.mxu0 %v225
      %v463 = vpop.f32.mrf.mxu0
      %v464 = vadd.f32 0.0, %v463
      %v465 = vpop.f32.mrf.mxu0
      %v466 = vadd.f32 0.0, %v465
      %467 = vmatprep.mubr.f32.mxu0 %v228
      %468 = vmatmul.mubr.f32.gmra.mxu0 %v227
      %v469 = vpop.f32.mrf.mxu0
      %v470 = vadd.f32 0.0, %v469
      %v471 = vpop.f32.mrf.mxu0
      %v472 = vadd.f32 0.0, %v471
      %473 = vmatprep.mubr.f32.mxu0 %v230
      %474 = vmatmul.mubr.f32.gmra.mxu0 %v229
      %v475 = vpop.f32.mrf.mxu0
      %v476 = vadd.f32 0.0, %v475
      %v477 = vpop.f32.mrf.mxu0
      %v478 = vadd.f32 0.0, %v477
      %479 = vmatprep.mubr.f32.mxu0 %v232
      %480 = vmatmul.mubr.f32.gmra.mxu0 %v231
      %v481 = vpop.f32.mrf.mxu0
      %v482 = vadd.f32 0.0, %v481
      %v483 = vpop.f32.mrf.mxu0
      %v484 = vadd.f32 0.0, %v483
      %485 = vmatprep.mubr.f32.mxu0 %v234
      %486 = vmatmul.mubr.f32.gmra.mxu0 %v233
      %v487 = vpop.f32.mrf.mxu0
      %v488 = vadd.f32 0.0, %v487
      %v489 = vpop.f32.mrf.mxu0
      %v490 = vadd.f32 0.0, %v489
      %491 = vmatprep.mubr.f32.mxu0 %v236
      %492 = vmatmul.mubr.f32.gmra.mxu0 %v235
      %v493 = vpop.f32.mrf.mxu0
      %v494 = vadd.f32 0.0, %v493
      %v495 = vpop.f32.mrf.mxu0
      %v496 = vadd.f32 0.0, %v495
      %497 = vmatprep.mubr.f32.mxu0 %v238
      %498 = vmatmul.mubr.f32.gmra.mxu0 %v237
      %v499 = vpop.f32.mrf.mxu0
      %v500 = vadd.f32 0.0, %v499
      %v501 = vpop.f32.mrf.mxu0
      %v502 = vadd.f32 0.0, %v501
      %503 = vmatprep.mubr.f32.mxu0 %v240
      %504 = vmatmul.mubr.f32.gmra.mxu0 %v239
      %v505 = vpop.f32.mrf.mxu0
      %v506 = vadd.f32 0.0, %v505
      %v507 = vpop.f32.mrf.mxu0
      %v508 = vadd.f32 0.0, %v507
      %509 = vmatprep.mubr.f32.mxu0 %v242
      %510 = vmatmul.mubr.f32.gmra.mxu0 %v241
      %v511 = vpop.f32.mrf.mxu0
      %v512 = vadd.f32 0.0, %v511
      %v513 = vpop.f32.mrf.mxu0
      %v514 = vadd.f32 0.0, %v513
      %515 = vmatprep.mubr.f32.mxu0 %v244
      %516 = vmatmul.mubr.f32.gmra.mxu0 %v243
      %v517 = vpop.f32.mrf.mxu0
      %v518 = vadd.f32 0.0, %v517
      %v519 = vpop.f32.mrf.mxu0
      %v520 = vadd.f32 0.0, %v519
      %521 = vmatprep.mubr.f32.mxu0 %v246
      %522 = vmatmul.mubr.f32.gmra.mxu0 %v245
      %v523 = vpop.f32.mrf.mxu0
      %v524 = vadd.f32 0.0, %v523
      %v525 = vpop.f32.mrf.mxu0
      %v526 = vadd.f32 0.0, %v525
      %527 = vmatprep.mubr.f32.mxu0 %v248
      %528 = vmatmul.mubr.f32.gmra.mxu0 %v247
      %v529 = vpop.f32.mrf.mxu0
      %v530 = vadd.f32 0.0, %v529
      %v531 = vpop.f32.mrf.mxu0
      %v532 = vadd.f32 0.0, %v531
      %533 = vmatprep.mubr.f32.mxu0 %v250
      %534 = vmatmul.mubr.f32.gmra.mxu0 %v249
      %v535 = vpop.f32.mrf.mxu0
      %v536 = vadd.f32 0.0, %v535
      %v537 = vpop.f32.mrf.mxu0
      %v538 = vadd.f32 0.0, %v537
      %539 = vmatprep.mubr.f32.mxu0 %v252
      %540 = vmatmul.mubr.f32.gmra.mxu0 %v251
      %v541 = vpop.f32.mrf.mxu0
      %v542 = vadd.f32 0.0, %v541
      %v543 = vpop.f32.mrf.mxu0
      %v544 = vadd.f32 0.0, %v543
      %545 = vmatprep.mubr.f32.mxu0 %v254
      %546 = vmatmul.mubr.f32.gmra.mxu0 %v253
      %v547 = vpop.f32.mrf.mxu0
      %v548 = vadd.f32 0.0, %v547
      %v549 = vpop.f32.mrf.mxu0
      %v550 = vadd.f32 0.0, %v549
      %551 = vmatprep.mubr.f32.mxu0 %v256
      %552 = vmatmul.mubr.f32.gmra.mxu0 %v255
      %v553 = vpop.f32.mrf.mxu0
      %v554 = vadd.f32 0.0, %v553
      %v555 = vpop.f32.mrf.mxu0
      %v556 = vadd.f32 0.0, %v555
      %557 = vmatprep.mubr.f32.mxu0 %v258
      %558 = vmatmul.mubr.f32.gmra.mxu0 %v257
      %v559 = vpop.f32.mrf.mxu0
      %v560 = vadd.f32 0.0, %v559
      %v561 = vpop.f32.mrf.mxu0
      %v562 = vadd.f32 0.0, %v561
      %563 = vmatprep.mubr.f32.mxu0 %v260
      %564 = vmatmul.mubr.f32.gmra.mxu0 %v259
      %v565 = vpop.f32.mrf.mxu0
      %v566 = vadd.f32 0.0, %v565
      %v567 = vpop.f32.mrf.mxu0
      %v568 = vadd.f32 0.0, %v567
      %569 = vmatprep.mubr.f32.mxu0 %v262
      %570 = vmatmul.mubr.f32.gmra.mxu0 %v261
      %v571 = vpop.f32.mrf.mxu0
      %v572 = vadd.f32 0.0, %v571
      %v573 = vpop.f32.mrf.mxu0
      %v574 = vadd.f32 0.0, %v573
      %575 = vmatprep.mubr.f32.mxu0 %v264
      %576 = vmatmul.mubr.f32.gmra.mxu0 %v263
      %v577 = vpop.f32.mrf.mxu0
      %v578 = vadd.f32 0.0, %v577
      %v579 = vpop.f32.mrf.mxu0
      %v580 = vadd.f32 0.0, %v579
      %581 = vmatprep.mubr.f32.mxu0 %v266
      %582 = vmatmul.mubr.f32.gmra.mxu0 %v265
      %v583 = vpop.f32.mrf.mxu0
      %v584 = vadd.f32 0.0, %v583
      %v585 = vpop.f32.mrf.mxu0
      %v586 = vadd.f32 0.0, %v585
      %587 = vdwg.mxu0
      %588 = vst [vmem:[%s201] sm:$0xff] %v398
      %589 = vst [vmem:[%s201 + $0x8] sm:$0xff] %v400
      %590 = vst [vmem:[%s201 + $0x10] sm:$0xff] %v404
      %591 = vst [vmem:[%s201 + $0x18] sm:$0xff] %v406
      %592 = vst [vmem:[%s201 + $0x20] sm:$0xff] %v410
      %593 = vst [vmem:[%s201 + $0x28] sm:$0xff] %v412
      %594 = vst [vmem:[%s201 + $0x30] sm:$0xff] %v416
      %595 = vst [vmem:[%s201 + $0x38] sm:$0xff] %v418
      %596 = vst [vmem:[%s201 + $0x40] sm:$0xff] %v422
      %597 = vst [vmem:[%s201 + $0x48] sm:$0xff] %v424
      %598 = vst [vmem:[%s201 + $0x50] sm:$0xff] %v428
      %599 = vst [vmem:[%s201 + $0x58] sm:$0xff] %v430
      %600 = vst [vmem:[%s201 + $0x60] sm:$0xff] %v434
      %601 = vst [vmem:[%s201 + $0x68] sm:$0xff] %v436
      %602 = vst [vmem:[%s201 + $0x70] sm:$0xff] %v440
      %603 = vst [vmem:[%s201 + $0x78] sm:$0xff] %v442
      %604 = vst [vmem:[%s201 + $0x80] sm:$0xff] %v446
      %605 = vst [vmem:[%s201 + $0x88] sm:$0xff] %v448
      %606 = vst [vmem:[%s201 + $0x90] sm:$0xff] %v452
      %607 = vst [vmem:[%s201 + $0x98] sm:$0xff] %v454
      %608 = vst [vmem:[%s201 + $0xa0] sm:$0xff] %v458
      %609 = vst [vmem:[%s201 + $0xa8] sm:$0xff] %v460
      %610 = vst [vmem:[%s201 + $0xb0] sm:$0xff] %v464
      %611 = vst [vmem:[%s201 + $0xb8] sm:$0xff] %v466
      %612 = vst [vmem:[%s201 + $0xc0] sm:$0xff] %v470
      %613 = vst [vmem:[%s201 + $0xc8] sm:$0xff] %v472
      %614 = vst [vmem:[%s201 + $0xd0] sm:$0xff] %v476
      %615 = vst [vmem:[%s201 + $0xd8] sm:$0xff] %v478
      %616 = vst [vmem:[%s201 + $0xe0] sm:$0xff] %v482
      %617 = vst [vmem:[%s201 + $0xe8] sm:$0xff] %v484
      %618 = vst [vmem:[%s201 + $0xf0] sm:$0xff] %v488
      %619 = vst [vmem:[%s201 + $0xf8] sm:$0xff] %v490
      %620 = vst [vmem:[%s201 + $0x100] sm:$0xff] %v494
      %621 = vst [vmem:[%s201 + $0x108] sm:$0xff] %v496
      %622 = vst [vmem:[%s201 + $0x110] sm:$0xff] %v500
      %623 = vst [vmem:[%s201 + $0x118] sm:$0xff] %v502
      %624 = vst [vmem:[%s201 + $0x120] sm:$0xff] %v506
      %625 = vst [vmem:[%s201 + $0x128] sm:$0xff] %v508
      %626 = vst [vmem:[%s201 + $0x130] sm:$0xff] %v512
      %627 = vst [vmem:[%s201 + $0x138] sm:$0xff] %v514
      %628 = vst [vmem:[%s201 + $0x140] sm:$0xff] %v518
      %629 = vst [vmem:[%s201 + $0x148] sm:$0xff] %v520
      %630 = vst [vmem:[%s201 + $0x150] sm:$0xff] %v524
      %631 = vst [vmem:[%s201 + $0x158] sm:$0xff] %v526
      %632 = vst [vmem:[%s201 + $0x160] sm:$0xff] %v530
      %633 = vst [vmem:[%s201 + $0x168] sm:$0xff] %v532
      %634 = vst [vmem:[%s201 + $0x170] sm:$0xff] %v536
      %635 = vst [vmem:[%s201 + $0x178] sm:$0xff] %v538
      %636 = vst [vmem:[%s201 + $0x180] sm:$0xff] %v542
      %637 = vst [vmem:[%s201 + $0x188] sm:$0xff] %v544
      %638 = vst [vmem:[%s201 + $0x190] sm:$0xff] %v548
      %639 = vst [vmem:[%s201 + $0x198] sm:$0xff] %v550
      %640 = vst [vmem:[%s201 + $0x1a0] sm:$0xff] %v554
      %641 = vst [vmem:[%s201 + $0x1a8] sm:$0xff] %v556
      %642 = vst [vmem:[%s201 + $0x1b0] sm:$0xff] %v560
      %643 = vst [vmem:[%s201 + $0x1b8] sm:$0xff] %v562
      %644 = vst [vmem:[%s201 + $0x1c0] sm:$0xff] %v566
      %645 = vst [vmem:[%s201 + $0x1c8] sm:$0xff] %v568
      %646 = vst [vmem:[%s201 + $0x1d0] sm:$0xff] %v572
      %647 = vst [vmem:[%s201 + $0x1d8] sm:$0xff] %v574
      %648 = vst [vmem:[%s201 + $0x1e0] sm:$0xff] %v578
      %649 = vst [vmem:[%s201 + $0x1e8] sm:$0xff] %v580
      %650 = vst [vmem:[%s201 + $0x1f0] sm:$0xff] %v584
      %651 = vst [vmem:[%s201 + $0x1f8] sm:$0xff] %v586
      %s652 = smul.u32 2, %s18
      %p653 = scmp.lt.s32.totalorder %s17, 1
      %s654 = scalar_select %p653, %s17, 1
      %p655 = scmp.lt.s32.totalorder %s652, 1
      %s656 = scalar_select %p655, %s652, 1
      %s657 = smul.addr %s654, 64
      %s658 = sadd.s32 %s656, %s657
      %s659 = smul.addr %s658, 8
      %s660 = scalar_lea.vmem %s2, %s659
      // Predicated region
      $region29: #{channel_video_attention.3} parent=27 // pred_check
        %p661 = pneg %p99
      $region30: #{channel_video_attention.3} parent=27 // pred_check_branch
        %663 = sbr.rel (%p661) target = $region32
      $region31: #{channel_video_attention.3} parent=27 // pred_region
        %s664 = smul.u32 2, %s18
      $region32: #{channel_video_attention.3} parent=27 // pred_fallthru
        _
    $region28: #{channel_video_attention.3} parent=5 // pred_fallthru
      _
    %p665 = scmp.le.s32.totalorder 2, %s8
    // Predicated region
    $region33: #{channel_video_attention.3} parent=5 // pred_check
      %p666 = pneg %p665
    $region34: #{channel_video_attention.3} parent=5 // pred_check_branch
      %668 = sbr.rel (%p666) target = $region36
    $region35: #{channel_video_attention.3} parent=5 // pred_region
      %s669 = ssub.s32 %s8, 2
      // Predicated region
      $region37: #{channel_video_attention.3} parent=35 // pred_check
        %p670 = pneg %p105
      $region38: #{channel_video_attention.3} parent=35 // pred_check_branch
        %672 = sbr.rel (%p670) target = $region40
      $region39: #{channel_video_attention.3} parent=35 // pred_region
        %s673 = smul.u32 2, %s20
        %p674 = scmp.lt.s32.totalorder %s19, 1
        %s675 = scalar_select %p674, %s19, 1
        %p676 = scmp.lt.s32.totalorder %s673, 1
        %s677 = scalar_select %p676, %s673, 1
        %s678 = smul.addr %s675, 64
        %s679 = sadd.s32 %s677, %s678
        %s680 = smul.addr %s679, 8
        %s681 = scalar_lea.vmem %s2, %s680
      $region40: #{channel_video_attention.3} parent=35 // pred_fallthru
        _
    $region36: #{channel_video_attention.3} parent=5 // pred_fallthru
      _
  $region6: #{channel_video_attention.3} parent=0 // loop_footer
    %s12 = sadd.s32 1, %s8
  $region7: #{channel_video_attention.3} parent=0 // loop_footer_branch
    %7 = sbr.rel target = $region3
  $region8: #{channel_video_attention.3} parent=0 // loop_exit
    _

</llo_original>
